<compile_context>
chip_gen: v5e
topology: v5e:2x2
jax: 0.10.0
libtpu: 0.0.40
codegen_flags: <defaults>
</compile_context>

<pallas_src>
import functools
import math

import jax
import jax.numpy as jnp
from jax.experimental import pallas as pl
from jax.experimental.pallas import tpu as pltpu

INPUT_SIZE = 11     # module default
CNN_CH = 64
HIDDEN = 128
ATTN = 64
NUM_GATES = 4       # PyTorch gate order: i, f, g, o (we repack to i, f, o, g)
KPAD = 8            # conv taps (3) zero-padded to one sublane tile

HP = jax.lax.Precision.HIGHEST   # reference runs at full f32 matmul precision


# ---------------------------------------------------------------------------
# Pallas kernel: whole forward pass, whole batch, single invocation.
# ---------------------------------------------------------------------------
def tpa_cnn_lstm_kernel(win_ref,                       # (2*T*B, KPAD) im2col, [even ; odd]
                        cw_ref, cb_ref,                # (KPAD, C), (1, C)
                        wih_ref, whh_ref, b_ref,       # (C, 4H), (H, 4H), (1, 4H) cols [i|f|o|g]
                        wu_ref, wub_ref,               # (H, 2A), (1, 2A)   fused [W | U]
                        vw_ref, vb_ref,                # (1, A), (1, 1)     TPA v
                        fcw_ref, fcb_ref,              # (H, 1), (1, 1)
                        out_ref,                       # (T*B, 1), row = t*B + b
                        hbuf,                          # VMEM scratch (T*B, H)
                        *, batch, seq):
    B, T = batch, seq
    H = whh_ref.shape[0]
    A = vw_ref.shape[1]
    f32 = jnp.float32

    # --- Conv1d + ReLU as ONE im2col matmul; MaxPool(2,2) = max of the halves --
    conv = jnp.maximum(
        jnp.dot(win_ref[...], cw_ref[...], preferred_element_type=f32) + cb_ref[...], 0.0)
    pooled = jnp.maximum(conv[:T * B, :], conv[T * B:, :])             # (T*B, C)

    # --- Hoisted LSTM input projection for all timesteps (biases folded) -------
    xproj = jnp.dot(pooled, wih_ref[...],
                    preferred_element_type=f32) + b_ref[...]           # (T*B, 4H)

    # --- LSTM recurrence: one fused (B,H)@(H,4H) matmul per step ---------------
    whh = whh_ref[...]
    h = jnp.zeros((B, H), f32)
    c = jnp.zeros((B, H), f32)
    for t in range(T):                                                 # T=5, static unroll
        gates = xproj[t * B:(t + 1) * B, :] + jnp.dot(
            h, whh, preferred_element_type=f32)                        # (B, 4H) [i|f|o|g]
        sig = jax.nn.sigmoid(gates[:, :3 * H])                         # i, f, o in one pass
        i_g = sig[:, 0:H]
        f_g = sig[:, H:2 * H]
        o_g = sig[:, 2 * H:3 * H]
        g_g = jnp.tanh(gates[:, 3 * H:])
        c = f_g * c + i_g * g_g
        h = o_g * jnp.tanh(c)
        hbuf[t * B:(t + 1) * B, :] = h                                 # sublane-aligned store

    lstm_out = hbuf[...]                                               # (T*B, H)

    # --- Temporal pattern attention (faithful cross-batch broadcast), batched --
    wuh = jnp.dot(lstm_out, wu_ref[...],
                  preferred_element_type=f32) + wub_ref[...]           # (T*B, 2A)
    Wh = wuh[:, :A].reshape(T, B, A)
    Uh = wuh[:, A:].reshape(T, B, A)
    # u[t, i, j, :] = tanh(U(h_{i,t}) + W(h_{j,t})); softmax over j.
    u = jnp.tanh(Uh[:, :, None, :] + Wh[:, None, :, :])                # (T, B, B, A)
    sc = jnp.sum(u * vw_ref[...], axis=-1) + vb_ref[...]               # (T, B, B)
    sc = sc - jnp.max(sc, axis=-1, keepdims=True)
    e = jnp.exp(sc)
    wts = e * pl.reciprocal(jnp.sum(e, axis=-1, keepdims=True), approx=True)   # (T, B, B)

    # --- Final Linear pushed through the attention ------------------------------
    # out[t*B+i] = sum_j wts[t,i,j] * (lstm_out[t*B+j] . fcw) + fcb
    y = jnp.dot(lstm_out, fcw_ref[...], preferred_element_type=f32)    # (T*B, 1)
    fcb = fcb_ref[...]
    for t in range(T):
        out_ref[t * B:(t + 1) * B, :] = (
            jnp.dot(wts[t], y[t * B:(t + 1) * B, :], preferred_element_type=f32) + fcb)


# ---------------------------------------------------------------------------
# One-time parameter repack (hoisted out of the per-call path).
# ---------------------------------------------------------------------------
def pack_params(params):
    H, A, C = HIDDEN, ATTN, CNN_CH

    def reorder_gates(m):   # last-dim gate blocks [i|f|g|o] -> [i|f|o|g]
        return jnp.concatenate(
            [m[..., :2 * H], m[..., 3 * H:], m[..., 2 * H:3 * H]], axis=-1)

    cw = jnp.pad(params["conv_w"][:, 0, :].T, ((0, KPAD - 3), (0, 0)))        # (8, C)
    cb = params["conv_b"].reshape(1, C)
    wih = reorder_gates(params["w_ih"].T.astype(jnp.float32))                 # (C, 4H)
    whh = reorder_gates(params["w_hh"].T.astype(jnp.float32))                 # (H, 4H)
    b = reorder_gates((params["b_ih"] + params["b_hh"]).reshape(1, NUM_GATES * H))
    wu = jnp.concatenate([params["tpa_w_w"].T, params["tpa_u_w"].T], axis=1)  # (H, 2A)
    wub = jnp.concatenate([params["tpa_w_b"], params["tpa_u_b"]]).reshape(1, 2 * A)
    vw = params["tpa_v_w"].reshape(1, A)
    vb = params["tpa_v_b"].reshape(1, 1)
    fcw = params["fc_w"].T                                                    # (H, 1)
    fcb = params["fc_b"].reshape(1, 1)
    return (cw, cb, wih, whh, b, wu, wub, vw, vb, fcw, fcb)


# ---------------------------------------------------------------------------
# Wrapper: im2col prep + pallas_call.
# ---------------------------------------------------------------------------
@jax.jit
def tpa_cnn_lstm_forward(x, packed):
    """x: (B, input_size) f32. Returns (B, T, 1) f32 like the PyTorch module."""
    B, L = x.shape
    T = L // 2
    x = x.astype(jnp.float32)
    xp = jnp.pad(x, ((0, 0), (1, 1)))                           # conv padding=1

    # im2col windows, row index = t*B + b; even/odd conv columns of each pooling
    # pair stacked as [even ; odd]; K (=3) zero-padded to one sublane tile.
    win_e = jnp.concatenate([xp[:, 2 * t:2 * t + 3] for t in range(T)], axis=0)
    win_o = jnp.concatenate([xp[:, 2 * t + 1:2 * t + 4] for t in range(T)], axis=0)
    win = jnp.pad(jnp.concatenate([win_e, win_o], axis=0), ((0, 0), (0, KPAD - 3)))

    vmem = pl.BlockSpec(memory_space=pltpu.MemorySpace.VMEM)
    out_flat = pl.pallas_call(
        functools.partial(tpa_cnn_lstm_kernel, batch=B, seq=T),
        out_shape=jax.ShapeDtypeStruct((T * B, 1), jnp.float32),
        in_specs=[vmem] * 12,
        out_specs=vmem,
        scratch_shapes=[pltpu.VMEM((T * B, HIDDEN), jnp.float32)],
    )(win, *packed)

    # rows are (t, b) ordered -> (B, T, 1) like PyTorch
    return out_flat.reshape(T, B, 1).transpose(1, 0, 2)


# ---------------------------------------------------------------------------
# Pure-JAX reference (PyTorch weight layout / exact PyTorch semantics).
# ---------------------------------------------------------------------------
def reference_forward(x, params):
    B, L = x.shape
    T = L // 2
    xp = jnp.pad(x.astype(jnp.float32), ((0, 0), (1, 1)))
    windows = jnp.stack([xp[:, l:l + 3] for l in range(L)], axis=1)        # (B, L, 3)
    conv = jnp.einsum("blk,ck->blc", windows, params["conv_w"][:, 0, :],
                      precision=HP) + params["conv_b"][None, None, :]
    conv = jnp.maximum(conv, 0.0)
    pooled = jnp.maximum(conv[:, 0:2 * T:2, :], conv[:, 1:2 * T:2, :])     # (B, T, 64)

    h = jnp.zeros((B, HIDDEN), jnp.float32)
    c = jnp.zeros((B, HIDDEN), jnp.float32)
    outs = []
    for t in range(T):
        g = (jnp.dot(pooled[:, t], params["w_ih"].T, precision=HP) + params["b_ih"]
             + jnp.dot(h, params["w_hh"].T, precision=HP) + params["b_hh"])
        i, f, gg, o = jnp.split(g, 4, axis=1)
        i, f, o = jax.nn.sigmoid(i), jax.nn.sigmoid(f), jax.nn.sigmoid(o)
        gg = jnp.tanh(gg)
        c = f * c + i * gg
        h = o * jnp.tanh(c)
        outs.append(h)
    lstm_out = jnp.stack(outs, axis=1)                                     # (B, T, H)

    Wh = jnp.einsum("bth,ah->bta", lstm_out, params["tpa_w_w"],
                    precision=HP) + params["tpa_w_b"]
    Uh = jnp.einsum("bth,ah->bta", lstm_out, params["tpa_u_w"],
                    precision=HP) + params["tpa_u_b"]
    u = jnp.tanh(Wh[None, :, :, :] + Uh[:, None, :, :])                    # (B, B, T, A)
    scores = jnp.einsum("ijta,a->ijt", u, params["tpa_v_w"][0],
                        precision=HP) + params["tpa_v_b"][0]
    weights = jax.nn.softmax(scores, axis=1)[..., None]                    # (B, B, T, 1)
    attended = (lstm_out[None, :, :, :] * weights).sum(axis=1)             # (B, T, H)
    return jnp.einsum("bth,oh->bto", attended, params["fc_w"],
                      precision=HP) + params["fc_b"][None, None, :]        # (B, T, 1)


# ---------------------------------------------------------------------------
# Deterministic synthetic parameters (PyTorch-style uniform bounds).
# ---------------------------------------------------------------------------
def init_params(key):
    ks = jax.random.split(key, 14)

    def u(k, shape, fan_in):
        bound = 1.0 / math.sqrt(fan_in)
        return jax.random.uniform(k, shape, jnp.float32, -bound, bound)

    g4h = NUM_GATES * HIDDEN
    return {
        "conv_w": u(ks[0], (CNN_CH, 1, 3), 3),
        "conv_b": u(ks[1], (CNN_CH,), 3),
        "w_ih": u(ks[2], (g4h, CNN_CH), HIDDEN),
        "w_hh": u(ks[3], (g4h, HIDDEN), HIDDEN),
        "b_ih": u(ks[4], (g4h,), HIDDEN),
        "b_hh": u(ks[5], (g4h,), HIDDEN),
        "tpa_w_w": u(ks[6], (ATTN, HIDDEN), HIDDEN),
        "tpa_w_b": u(ks[7], (ATTN,), HIDDEN),
        "tpa_u_w": u(ks[8], (ATTN, HIDDEN), HIDDEN),
        "tpa_u_b": u(ks[9], (ATTN,), HIDDEN),
        "tpa_v_w": u(ks[10], (1, ATTN), ATTN),
        "tpa_v_b": u(ks[11], (1,), ATTN),
        "fc_w": u(ks[12], (1, HIDDEN), HIDDEN),
        "fc_b": u(ks[13], (1,), HIDDEN),
    }


if __name__ == "__main__":
    key = jax.random.PRNGKey(0)
    k_param, k_x = jax.random.split(key)
    params = init_params(k_param)
    packed = pack_params(params)          # one-time weight relayout, off the call path

    B = 8                                 # one full sublane tile; keeps every slice aligned
    x = jax.random.normal(k_x, (B, INPUT_SIZE), jnp.float32)

    out = jax.block_until_ready(tpa_cnn_lstm_forward(x, packed))
    ref = jax.block_until_ready(reference_forward(x, params))

    T = INPUT_SIZE // 2
    assert out.shape == (B, T, 1), out.shape
    max_err = float(jnp.max(jnp.abs(out - ref)))
    # Tolerance covers the approx-reciprocal softmax normalization and matmul
    # reassociation (fc pushed through attention) vs. the HIGHEST-precision reference.
    assert jnp.allclose(out, ref, atol=2e-3, rtol=2e-3), (
        f"mismatch: max abs err {max_err}")
    print("KERNEL_OK")
</pallas_src>

<mosaic_0001>
module attributes {stable_mosaic.version = 11 : i64} {
  func.func @tpa_cnn_lstm_kernel(%arg0: memref<80x8xf32, #tpu.memory_space<vmem>>, %arg1: memref<8x64xf32, #tpu.memory_space<vmem>>, %arg2: memref<1x64xf32, #tpu.memory_space<vmem>>, %arg3: memref<64x512xf32, #tpu.memory_space<vmem>>, %arg4: memref<128x512xf32, #tpu.memory_space<vmem>>, %arg5: memref<1x512xf32, #tpu.memory_space<vmem>>, %arg6: memref<128x128xf32, #tpu.memory_space<vmem>>, %arg7: memref<1x128xf32, #tpu.memory_space<vmem>>, %arg8: memref<1x64xf32, #tpu.memory_space<vmem>>, %arg9: memref<1x1xf32, #tpu.memory_space<vmem>>, %arg10: memref<128x1xf32, #tpu.memory_space<vmem>>, %arg11: memref<1x1xf32, #tpu.memory_space<vmem>>, %arg12: memref<40x1xf32, #tpu.memory_space<vmem>>, %arg13: memref<40x128xf32, #tpu.memory_space<vmem>>) attributes {dimension_semantics = [], scalar_prefetch = 0 : i64, scratch_operands = 1 : i64, tpu.core_type = #tpu.core_type<tc>} {
    %c0 = arith.constant 0 : index
    %c0_0 = arith.constant 0 : index
    %0 = vector.load %arg0[%c0, %c0_0] : memref<80x8xf32, #tpu.memory_space<vmem>>, vector<80x8xf32>
    %c0_1 = arith.constant 0 : index
    %c0_2 = arith.constant 0 : index
    %1 = vector.load %arg1[%c0_1, %c0_2] : memref<8x64xf32, #tpu.memory_space<vmem>>, vector<8x64xf32>
    %cst = arith.constant dense<0.000000e+00> : vector<80x64xf32>
    %2 = tpu.matmul %0, %1, %cst {dimension_numbers = #tpu.dot_dimension_numbers<[1], [0], [0], [1], [0, 0, 1, 1], [], []>} : vector<80x8xf32>, vector<8x64xf32>, vector<80x64xf32> -> vector<80x64xf32>
    %c0_3 = arith.constant 0 : index
    %c0_4 = arith.constant 0 : index
    %3 = vector.load %arg2[%c0_3, %c0_4] : memref<1x64xf32, #tpu.memory_space<vmem>>, vector<1x64xf32>
    %4 = vector.broadcast %3 : vector<1x64xf32> to vector<80x64xf32>
    %5 = arith.addf %2, %4 : vector<80x64xf32>
    %cst_5 = arith.constant 0.000000e+00 : f32
    %6 = vector.broadcast %cst_5 : f32 to vector<80x64xf32>
    %7 = arith.maximumf %5, %6 : vector<80x64xf32>
    %8 = vector.extract_strided_slice %7 {offsets = [0, 0], sizes = [40, 64], strides = [1, 1]} : vector<80x64xf32> to vector<40x64xf32>
    %9 = vector.extract_strided_slice %7 {offsets = [40, 0], sizes = [40, 64], strides = [1, 1]} : vector<80x64xf32> to vector<40x64xf32>
    %10 = arith.maximumf %8, %9 : vector<40x64xf32>
    %c0_6 = arith.constant 0 : index
    %c0_7 = arith.constant 0 : index
    %11 = vector.load %arg3[%c0_6, %c0_7] : memref<64x512xf32, #tpu.memory_space<vmem>>, vector<64x512xf32>
    %cst_8 = arith.constant dense<0.000000e+00> : vector<40x512xf32>
    %12 = tpu.matmul %10, %11, %cst_8 {dimension_numbers = #tpu.dot_dimension_numbers<[1], [0], [0], [1], [0, 0, 1, 1], [], []>} : vector<40x64xf32>, vector<64x512xf32>, vector<40x512xf32> -> vector<40x512xf32>
    %c0_9 = arith.constant 0 : index
    %c0_10 = arith.constant 0 : index
    %13 = vector.load %arg5[%c0_9, %c0_10] : memref<1x512xf32, #tpu.memory_space<vmem>>, vector<1x512xf32>
    %14 = vector.broadcast %13 : vector<1x512xf32> to vector<40x512xf32>
    %15 = arith.addf %12, %14 : vector<40x512xf32>
    %c0_11 = arith.constant 0 : index
    %c0_12 = arith.constant 0 : index
    %16 = vector.load %arg4[%c0_11, %c0_12] : memref<128x512xf32, #tpu.memory_space<vmem>>, vector<128x512xf32>
    %cst_13 = arith.constant 0.000000e+00 : f32
    %17 = vector.broadcast %cst_13 : f32 to vector<8x128xf32>
    %cst_14 = arith.constant 0.000000e+00 : f32
    %18 = vector.broadcast %cst_14 : f32 to vector<8x128xf32>
    %19 = vector.extract_strided_slice %15 {offsets = [0, 0], sizes = [8, 512], strides = [1, 1]} : vector<40x512xf32> to vector<8x512xf32>
    %cst_15 = arith.constant dense<0.000000e+00> : vector<8x512xf32>
    %20 = tpu.matmul %17, %16, %cst_15 {dimension_numbers = #tpu.dot_dimension_numbers<[1], [0], [0], [1], [0, 0, 1, 1], [], []>} : vector<8x128xf32>, vector<128x512xf32>, vector<8x512xf32> -> vector<8x512xf32>
    %21 = arith.addf %19, %20 : vector<8x512xf32>
    %22 = vector.extract_strided_slice %21 {offsets = [0, 0], sizes = [8, 384], strides = [1, 1]} : vector<8x512xf32> to vector<8x384xf32>
    %23 = arith.negf %22 : vector<8x384xf32>
    %24 = math.exp %23 : vector<8x384xf32>
    %cst_16 = arith.constant 1.000000e+00 : f32
    %25 = vector.broadcast %cst_16 : f32 to vector<8x384xf32>
    %26 = arith.addf %25, %24 : vector<8x384xf32>
    %27 = arith.divf %25, %26 : vector<8x384xf32>
    %28 = vector.extract_strided_slice %27 {offsets = [0, 0], sizes = [8, 128], strides = [1, 1]} : vector<8x384xf32> to vector<8x128xf32>
    %29 = vector.extract_strided_slice %27 {offsets = [0, 128], sizes = [8, 128], strides = [1, 1]} : vector<8x384xf32> to vector<8x128xf32>
    %30 = vector.extract_strided_slice %27 {offsets = [0, 256], sizes = [8, 128], strides = [1, 1]} : vector<8x384xf32> to vector<8x128xf32>
    %31 = vector.extract_strided_slice %21 {offsets = [0, 384], sizes = [8, 128], strides = [1, 1]} : vector<8x512xf32> to vector<8x128xf32>
    %32 = math.tanh %31 : vector<8x128xf32>
    %33 = arith.mulf %29, %18 : vector<8x128xf32>
    %34 = arith.mulf %28, %32 : vector<8x128xf32>
    %35 = arith.addf %33, %34 : vector<8x128xf32>
    %36 = math.tanh %35 : vector<8x128xf32>
    %37 = arith.mulf %30, %36 : vector<8x128xf32>
    %c0_17 = arith.constant 0 : index
    %c0_18 = arith.constant 0 : index
    %38 = vector.load %arg13[%c0_17, %c0_18] : memref<40x128xf32, #tpu.memory_space<vmem>>, vector<8x128xf32>
    tpu.vector_store %arg13[%c0_17, %c0_18], %37 {strides = array<i32>} : memref<40x128xf32, #tpu.memory_space<vmem>>, vector<8x128xf32>,
    %39 = vector.extract_strided_slice %15 {offsets = [8, 0], sizes = [8, 512], strides = [1, 1]} : vector<40x512xf32> to vector<8x512xf32>
    %cst_19 = arith.constant dense<0.000000e+00> : vector<8x512xf32>
    %40 = tpu.matmul %37, %16, %cst_19 {dimension_numbers = #tpu.dot_dimension_numbers<[1], [0], [0], [1], [0, 0, 1, 1], [], []>} : vector<8x128xf32>, vector<128x512xf32>, vector<8x512xf32> -> vector<8x512xf32>
    %41 = arith.addf %39, %40 : vector<8x512xf32>
    %42 = vector.extract_strided_slice %41 {offsets = [0, 0], sizes = [8, 384], strides = [1, 1]} : vector<8x512xf32> to vector<8x384xf32>
    %43 = arith.negf %42 : vector<8x384xf32>
    %44 = math.exp %43 : vector<8x384xf32>
    %cst_20 = arith.constant 1.000000e+00 : f32
    %45 = vector.broadcast %cst_20 : f32 to vector<8x384xf32>
    %46 = arith.addf %45, %44 : vector<8x384xf32>
    %47 = arith.divf %45, %46 : vector<8x384xf32>
    %48 = vector.extract_strided_slice %47 {offsets = [0, 0], sizes = [8, 128], strides = [1, 1]} : vector<8x384xf32> to vector<8x128xf32>
    %49 = vector.extract_strided_slice %47 {offsets = [0, 128], sizes = [8, 128], strides = [1, 1]} : vector<8x384xf32> to vector<8x128xf32>
    %50 = vector.extract_strided_slice %47 {offsets = [0, 256], sizes = [8, 128], strides = [1, 1]} : vector<8x384xf32> to vector<8x128xf32>
    %51 = vector.extract_strided_slice %41 {offsets = [0, 384], sizes = [8, 128], strides = [1, 1]} : vector<8x512xf32> to vector<8x128xf32>
    %52 = math.tanh %51 : vector<8x128xf32>
    %53 = arith.mulf %49, %35 : vector<8x128xf32>
    %54 = arith.mulf %48, %52 : vector<8x128xf32>
    %55 = arith.addf %53, %54 : vector<8x128xf32>
    %56 = math.tanh %55 : vector<8x128xf32>
    %57 = arith.mulf %50, %56 : vector<8x128xf32>
    %c8 = arith.constant 8 : index
    %c0_21 = arith.constant 0 : index
    %58 = vector.load %arg13[%c8, %c0_21] : memref<40x128xf32, #tpu.memory_space<vmem>>, vector<8x128xf32>
    tpu.vector_store %arg13[%c8, %c0_21], %57 {strides = array<i32>} : memref<40x128xf32, #tpu.memory_space<vmem>>, vector<8x128xf32>,
    %59 = vector.extract_strided_slice %15 {offsets = [16, 0], sizes = [8, 512], strides = [1, 1]} : vector<40x512xf32> to vector<8x512xf32>
    %cst_22 = arith.constant dense<0.000000e+00> : vector<8x512xf32>
    %60 = tpu.matmul %57, %16, %cst_22 {dimension_numbers = #tpu.dot_dimension_numbers<[1], [0], [0], [1], [0, 0, 1, 1], [], []>} : vector<8x128xf32>, vector<128x512xf32>, vector<8x512xf32> -> vector<8x512xf32>
    %61 = arith.addf %59, %60 : vector<8x512xf32>
    %62 = vector.extract_strided_slice %61 {offsets = [0, 0], sizes = [8, 384], strides = [1, 1]} : vector<8x512xf32> to vector<8x384xf32>
    %63 = arith.negf %62 : vector<8x384xf32>
    %64 = math.exp %63 : vector<8x384xf32>
    %cst_23 = arith.constant 1.000000e+00 : f32
    %65 = vector.broadcast %cst_23 : f32 to vector<8x384xf32>
    %66 = arith.addf %65, %64 : vector<8x384xf32>
    %67 = arith.divf %65, %66 : vector<8x384xf32>
    %68 = vector.extract_strided_slice %67 {offsets = [0, 0], sizes = [8, 128], strides = [1, 1]} : vector<8x384xf32> to vector<8x128xf32>
    %69 = vector.extract_strided_slice %67 {offsets = [0, 128], sizes = [8, 128], strides = [1, 1]} : vector<8x384xf32> to vector<8x128xf32>
    %70 = vector.extract_strided_slice %67 {offsets = [0, 256], sizes = [8, 128], strides = [1, 1]} : vector<8x384xf32> to vector<8x128xf32>
    %71 = vector.extract_strided_slice %61 {offsets = [0, 384], sizes = [8, 128], strides = [1, 1]} : vector<8x512xf32> to vector<8x128xf32>
    %72 = math.tanh %71 : vector<8x128xf32>
    %73 = arith.mulf %69, %55 : vector<8x128xf32>
    %74 = arith.mulf %68, %72 : vector<8x128xf32>
    %75 = arith.addf %73, %74 : vector<8x128xf32>
    %76 = math.tanh %75 : vector<8x128xf32>
    %77 = arith.mulf %70, %76 : vector<8x128xf32>
    %c16 = arith.constant 16 : index
    %c0_24 = arith.constant 0 : index
    %78 = vector.load %arg13[%c16, %c0_24] : memref<40x128xf32, #tpu.memory_space<vmem>>, vector<8x128xf32>
    tpu.vector_store %arg13[%c16, %c0_24], %77 {strides = array<i32>} : memref<40x128xf32, #tpu.memory_space<vmem>>, vector<8x128xf32>,
    %79 = vector.extract_strided_slice %15 {offsets = [24, 0], sizes = [8, 512], strides = [1, 1]} : vector<40x512xf32> to vector<8x512xf32>
    %cst_25 = arith.constant dense<0.000000e+00> : vector<8x512xf32>
    %80 = tpu.matmul %77, %16, %cst_25 {dimension_numbers = #tpu.dot_dimension_numbers<[1], [0], [0], [1], [0, 0, 1, 1], [], []>} : vector<8x128xf32>, vector<128x512xf32>, vector<8x512xf32> -> vector<8x512xf32>
    %81 = arith.addf %79, %80 : vector<8x512xf32>
    %82 = vector.extract_strided_slice %81 {offsets = [0, 0], sizes = [8, 384], strides = [1, 1]} : vector<8x512xf32> to vector<8x384xf32>
    %83 = arith.negf %82 : vector<8x384xf32>
    %84 = math.exp %83 : vector<8x384xf32>
    %cst_26 = arith.constant 1.000000e+00 : f32
    %85 = vector.broadcast %cst_26 : f32 to vector<8x384xf32>
    %86 = arith.addf %85, %84 : vector<8x384xf32>
    %87 = arith.divf %85, %86 : vector<8x384xf32>
    %88 = vector.extract_strided_slice %87 {offsets = [0, 0], sizes = [8, 128], strides = [1, 1]} : vector<8x384xf32> to vector<8x128xf32>
    %89 = vector.extract_strided_slice %87 {offsets = [0, 128], sizes = [8, 128], strides = [1, 1]} : vector<8x384xf32> to vector<8x128xf32>
    %90 = vector.extract_strided_slice %87 {offsets = [0, 256], sizes = [8, 128], strides = [1, 1]} : vector<8x384xf32> to vector<8x128xf32>
    %91 = vector.extract_strided_slice %81 {offsets = [0, 384], sizes = [8, 128], strides = [1, 1]} : vector<8x512xf32> to vector<8x128xf32>
    %92 = math.tanh %91 : vector<8x128xf32>
    %93 = arith.mulf %89, %75 : vector<8x128xf32>
    %94 = arith.mulf %88, %92 : vector<8x128xf32>
    %95 = arith.addf %93, %94 : vector<8x128xf32>
    %96 = math.tanh %95 : vector<8x128xf32>
    %97 = arith.mulf %90, %96 : vector<8x128xf32>
    %c24 = arith.constant 24 : index
    %c0_27 = arith.constant 0 : index
    %98 = vector.load %arg13[%c24, %c0_27] : memref<40x128xf32, #tpu.memory_space<vmem>>, vector<8x128xf32>
    tpu.vector_store %arg13[%c24, %c0_27], %97 {strides = array<i32>} : memref<40x128xf32, #tpu.memory_space<vmem>>, vector<8x128xf32>,
    %99 = vector.extract_strided_slice %15 {offsets = [32, 0], sizes = [8, 512], strides = [1, 1]} : vector<40x512xf32> to vector<8x512xf32>
    %cst_28 = arith.constant dense<0.000000e+00> : vector<8x512xf32>
    %100 = tpu.matmul %97, %16, %cst_28 {dimension_numbers = #tpu.dot_dimension_numbers<[1], [0], [0], [1], [0, 0, 1, 1], [], []>} : vector<8x128xf32>, vector<128x512xf32>, vector<8x512xf32> -> vector<8x512xf32>
    %101 = arith.addf %99, %100 : vector<8x512xf32>
    %102 = vector.extract_strided_slice %101 {offsets = [0, 0], sizes = [8, 384], strides = [1, 1]} : vector<8x512xf32> to vector<8x384xf32>
    %103 = arith.negf %102 : vector<8x384xf32>
    %104 = math.exp %103 : vector<8x384xf32>
    %cst_29 = arith.constant 1.000000e+00 : f32
    %105 = vector.broadcast %cst_29 : f32 to vector<8x384xf32>
    %106 = arith.addf %105, %104 : vector<8x384xf32>
    %107 = arith.divf %105, %106 : vector<8x384xf32>
    %108 = vector.extract_strided_slice %107 {offsets = [0, 0], sizes = [8, 128], strides = [1, 1]} : vector<8x384xf32> to vector<8x128xf32>
    %109 = vector.extract_strided_slice %107 {offsets = [0, 128], sizes = [8, 128], strides = [1, 1]} : vector<8x384xf32> to vector<8x128xf32>
    %110 = vector.extract_strided_slice %107 {offsets = [0, 256], sizes = [8, 128], strides = [1, 1]} : vector<8x384xf32> to vector<8x128xf32>
    %111 = vector.extract_strided_slice %101 {offsets = [0, 384], sizes = [8, 128], strides = [1, 1]} : vector<8x512xf32> to vector<8x128xf32>
    %112 = math.tanh %111 : vector<8x128xf32>
    %113 = arith.mulf %109, %95 : vector<8x128xf32>
    %114 = arith.mulf %108, %112 : vector<8x128xf32>
    %115 = arith.addf %113, %114 : vector<8x128xf32>
    %116 = math.tanh %115 : vector<8x128xf32>
    %117 = arith.mulf %110, %116 : vector<8x128xf32>
    %c32 = arith.constant 32 : index
    %c0_30 = arith.constant 0 : index
    %118 = vector.load %arg13[%c32, %c0_30] : memref<40x128xf32, #tpu.memory_space<vmem>>, vector<8x128xf32>
    tpu.vector_store %arg13[%c32, %c0_30], %117 {strides = array<i32>} : memref<40x128xf32, #tpu.memory_space<vmem>>, vector<8x128xf32>,
    %c0_31 = arith.constant 0 : index
    %c0_32 = arith.constant 0 : index
    %119 = vector.load %arg13[%c0_31, %c0_32] : memref<40x128xf32, #tpu.memory_space<vmem>>, vector<40x128xf32>
    %c0_33 = arith.constant 0 : index
    %c0_34 = arith.constant 0 : index
    %120 = vector.load %arg6[%c0_33, %c0_34] : memref<128x128xf32, #tpu.memory_space<vmem>>, vector<128x128xf32>
    %cst_35 = arith.constant dense<0.000000e+00> : vector<40x128xf32>
    %121 = tpu.matmul %119, %120, %cst_35 {dimension_numbers = #tpu.dot_dimension_numbers<[1], [0], [0], [1], [0, 0, 1, 1], [], []>} : vector<40x128xf32>, vector<128x128xf32>, vector<40x128xf32> -> vector<40x128xf32>
    %c0_36 = arith.constant 0 : index
    %c0_37 = arith.constant 0 : index
    %122 = vector.load %arg7[%c0_36, %c0_37] : memref<1x128xf32, #tpu.memory_space<vmem>>, vector<1x128xf32>
    %123 = vector.broadcast %122 : vector<1x128xf32> to vector<40x128xf32>
    %124 = arith.addf %121, %123 : vector<40x128xf32>
    %125 = vector.extract_strided_slice %124 {offsets = [0, 0], sizes = [40, 64], strides = [1, 1]} : vector<40x128xf32> to vector<40x64xf32>
    %126 = vector.shape_cast %125 : vector<40x64xf32> to vector<5x8x64xf32>
    %127 = vector.extract_strided_slice %124 {offsets = [0, 64], sizes = [40, 64], strides = [1, 1]} : vector<40x128xf32> to vector<40x64xf32>
    %128 = vector.shape_cast %127 : vector<40x64xf32> to vector<5x8x64xf32>
    %129 = vector.shape_cast %128 : vector<5x8x64xf32> to vector<5x8x1x64xf32>
    %130 = vector.shape_cast %126 : vector<5x8x64xf32> to vector<5x1x8x64xf32>
    %131 = vector.broadcast %129 : vector<5x8x1x64xf32> to vector<5x8x8x64xf32>
    %132 = vector.broadcast %130 : vector<5x1x8x64xf32> to vector<5x8x8x64xf32>
    %133 = arith.addf %131, %132 : vector<5x8x8x64xf32>
    %134 = math.tanh %133 : vector<5x8x8x64xf32>
    %c0_38 = arith.constant 0 : index
    %c0_39 = arith.constant 0 : index
    %135 = vector.load %arg8[%c0_38, %c0_39] : memref<1x64xf32, #tpu.memory_space<vmem>>, vector<1x64xf32>
    %136 = vector.shape_cast %135 : vector<1x64xf32> to vector<1x1x1x64xf32>
    %137 = vector.broadcast %136 : vector<1x1x1x64xf32> to vector<5x8x8x64xf32>
    %138 = arith.mulf %134, %137 : vector<5x8x8x64xf32>
    %cst_40 = arith.constant dense<0.000000e+00> : vector<5x8x8xf32>
    %139 = vector.multi_reduction <add>, %138, %cst_40 [3] : vector<5x8x8x64xf32> to vector<5x8x8xf32>
    %c0_41 = arith.constant 0 : index
    %c0_42 = arith.constant 0 : index
    %140 = vector.load %arg9[%c0_41, %c0_42] : memref<1x1xf32, #tpu.memory_space<vmem>>, vector<1x1xf32>
    %141 = vector.shape_cast %140 : vector<1x1xf32> to vector<1x1x1xf32>
    %142 = vector.broadcast %141 : vector<1x1x1xf32> to vector<5x8x8xf32>
    %143 = arith.addf %139, %142 : vector<5x8x8xf32>
    %cst_43 = arith.constant dense<0xFF800000> : vector<5x8xf32>
    %144 = vector.multi_reduction <maximumf>, %143, %cst_43 [2] : vector<5x8x8xf32> to vector<5x8xf32>
    %145 = vector.shape_cast %144 : vector<5x8xf32> to vector<5x8x1xf32>
    %146 = vector.broadcast %145 : vector<5x8x1xf32> to vector<5x8x8xf32>
    %147 = arith.subf %143, %146 : vector<5x8x8xf32>
    %148 = math.exp %147 : vector<5x8x8xf32>
    %cst_44 = arith.constant dense<0.000000e+00> : vector<5x8xf32>
    %149 = vector.multi_reduction <add>, %148, %cst_44 [2] : vector<5x8x8xf32> to vector<5x8xf32>
    %150 = vector.shape_cast %149 : vector<5x8xf32> to vector<5x8x1xf32>
    %151 = tpu.reciprocal %150 {approx = true} : vector<5x8x1xf32> -> vector<5x8x1xf32>
    %152 = vector.broadcast %151 : vector<5x8x1xf32> to vector<5x8x8xf32>
    %153 = arith.mulf %148, %152 : vector<5x8x8xf32>
    %c0_45 = arith.constant 0 : index
    %c0_46 = arith.constant 0 : index
    %154 = vector.load %arg10[%c0_45, %c0_46] : memref<128x1xf32, #tpu.memory_space<vmem>>, vector<128x1xf32>
    %cst_47 = arith.constant dense<0.000000e+00> : vector<40x1xf32>
    %155 = tpu.matmul %119, %154, %cst_47 {dimension_numbers = #tpu.dot_dimension_numbers<[1], [0], [0], [1], [0, 0, 1, 1], [], []>} : vector<40x128xf32>, vector<128x1xf32>, vector<40x1xf32> -> vector<40x1xf32>
    %c0_48 = arith.constant 0 : index
    %c0_49 = arith.constant 0 : index
    %156 = vector.load %arg11[%c0_48, %c0_49] : memref<1x1xf32, #tpu.memory_space<vmem>>, vector<1x1xf32>
    %157 = vector.extract_strided_slice %153 {offsets = [0, 0, 0], sizes = [1, 8, 8], strides = [1, 1, 1]} : vector<5x8x8xf32> to vector<1x8x8xf32>
    %158 = vector.shape_cast %157 : vector<1x8x8xf32> to vector<8x8xf32>
    %159 = vector.extract_strided_slice %155 {offsets = [0, 0], sizes = [8, 1], strides = [1, 1]} : vector<40x1xf32> to vector<8x1xf32>
    %cst_50 = arith.constant dense<0.000000e+00> : vector<8x1xf32>
    %160 = tpu.matmul %158, %159, %cst_50 {dimension_numbers = #tpu.dot_dimension_numbers<[1], [0], [0], [1], [0, 0, 1, 1], [], []>} : vector<8x8xf32>, vector<8x1xf32>, vector<8x1xf32> -> vector<8x1xf32>
    %161 = vector.broadcast %156 : vector<1x1xf32> to vector<8x1xf32>
    %162 = arith.addf %160, %161 : vector<8x1xf32>
    %c0_51 = arith.constant 0 : index
    %c0_52 = arith.constant 0 : index
    %163 = vector.load %arg12[%c0_51, %c0_52] : memref<40x1xf32, #tpu.memory_space<vmem>>, vector<8x1xf32>
    tpu.vector_store %arg12[%c0_51, %c0_52], %162 {strides = array<i32>} : memref<40x1xf32, #tpu.memory_space<vmem>>, vector<8x1xf32>,
    %164 = vector.extract_strided_slice %153 {offsets = [1, 0, 0], sizes = [1, 8, 8], strides = [1, 1, 1]} : vector<5x8x8xf32> to vector<1x8x8xf32>
    %165 = vector.shape_cast %164 : vector<1x8x8xf32> to vector<8x8xf32>
    %166 = vector.extract_strided_slice %155 {offsets = [8, 0], sizes = [8, 1], strides = [1, 1]} : vector<40x1xf32> to vector<8x1xf32>
    %cst_53 = arith.constant dense<0.000000e+00> : vector<8x1xf32>
    %167 = tpu.matmul %165, %166, %cst_53 {dimension_numbers = #tpu.dot_dimension_numbers<[1], [0], [0], [1], [0, 0, 1, 1], [], []>} : vector<8x8xf32>, vector<8x1xf32>, vector<8x1xf32> -> vector<8x1xf32>
    %168 = vector.broadcast %156 : vector<1x1xf32> to vector<8x1xf32>
    %169 = arith.addf %167, %168 : vector<8x1xf32>
    %c8_54 = arith.constant 8 : index
    %c0_55 = arith.constant 0 : index
    %170 = vector.load %arg12[%c8_54, %c0_55] : memref<40x1xf32, #tpu.memory_space<vmem>>, vector<8x1xf32>
    tpu.vector_store %arg12[%c8_54, %c0_55], %169 {strides = array<i32>} : memref<40x1xf32, #tpu.memory_space<vmem>>, vector<8x1xf32>,
    %171 = vector.extract_strided_slice %153 {offsets = [2, 0, 0], sizes = [1, 8, 8], strides = [1, 1, 1]} : vector<5x8x8xf32> to vector<1x8x8xf32>
    %172 = vector.shape_cast %171 : vector<1x8x8xf32> to vector<8x8xf32>
    %173 = vector.extract_strided_slice %155 {offsets = [16, 0], sizes = [8, 1], strides = [1, 1]} : vector<40x1xf32> to vector<8x1xf32>
    %cst_56 = arith.constant dense<0.000000e+00> : vector<8x1xf32>
    %174 = tpu.matmul %172, %173, %cst_56 {dimension_numbers = #tpu.dot_dimension_numbers<[1], [0], [0], [1], [0, 0, 1, 1], [], []>} : vector<8x8xf32>, vector<8x1xf32>, vector<8x1xf32> -> vector<8x1xf32>
    %175 = vector.broadcast %156 : vector<1x1xf32> to vector<8x1xf32>
    %176 = arith.addf %174, %175 : vector<8x1xf32>
    %c16_57 = arith.constant 16 : index
    %c0_58 = arith.constant 0 : index
    %177 = vector.load %arg12[%c16_57, %c0_58] : memref<40x1xf32, #tpu.memory_space<vmem>>, vector<8x1xf32>
    tpu.vector_store %arg12[%c16_57, %c0_58], %176 {strides = array<i32>} : memref<40x1xf32, #tpu.memory_space<vmem>>, vector<8x1xf32>,
    %178 = vector.extract_strided_slice %153 {offsets = [3, 0, 0], sizes = [1, 8, 8], strides = [1, 1, 1]} : vector<5x8x8xf32> to vector<1x8x8xf32>
    %179 = vector.shape_cast %178 : vector<1x8x8xf32> to vector<8x8xf32>
    %180 = vector.extract_strided_slice %155 {offsets = [24, 0], sizes = [8, 1], strides = [1, 1]} : vector<40x1xf32> to vector<8x1xf32>
    %cst_59 = arith.constant dense<0.000000e+00> : vector<8x1xf32>
    %181 = tpu.matmul %179, %180, %cst_59 {dimension_numbers = #tpu.dot_dimension_numbers<[1], [0], [0], [1], [0, 0, 1, 1], [], []>} : vector<8x8xf32>, vector<8x1xf32>, vector<8x1xf32> -> vector<8x1xf32>
    %182 = vector.broadcast %156 : vector<1x1xf32> to vector<8x1xf32>
    %183 = arith.addf %181, %182 : vector<8x1xf32>
    %c24_60 = arith.constant 24 : index
    %c0_61 = arith.constant 0 : index
    %184 = vector.load %arg12[%c24_60, %c0_61] : memref<40x1xf32, #tpu.memory_space<vmem>>, vector<8x1xf32>
    tpu.vector_store %arg12[%c24_60, %c0_61], %183 {strides = array<i32>} : memref<40x1xf32, #tpu.memory_space<vmem>>, vector<8x1xf32>,
    %185 = vector.extract_strided_slice %153 {offsets = [4, 0, 0], sizes = [1, 8, 8], strides = [1, 1, 1]} : vector<5x8x8xf32> to vector<1x8x8xf32>
    %186 = vector.shape_cast %185 : vector<1x8x8xf32> to vector<8x8xf32>
    %187 = vector.extract_strided_slice %155 {offsets = [32, 0], sizes = [8, 1], strides = [1, 1]} : vector<40x1xf32> to vector<8x1xf32>
    %cst_62 = arith.constant dense<0.000000e+00> : vector<8x1xf32>
    %188 = tpu.matmul %186, %187, %cst_62 {dimension_numbers = #tpu.dot_dimension_numbers<[1], [0], [0], [1], [0, 0, 1, 1], [], []>} : vector<8x8xf32>, vector<8x1xf32>, vector<8x1xf32> -> vector<8x1xf32>
    %189 = vector.broadcast %156 : vector<1x1xf32> to vector<8x1xf32>
    %190 = arith.addf %188, %189 : vector<8x1xf32>
    %c32_63 = arith.constant 32 : index
    %c0_64 = arith.constant 0 : index
    %191 = vector.load %arg12[%c32_63, %c0_64] : memref<40x1xf32, #tpu.memory_space<vmem>>, vector<8x1xf32>
    tpu.vector_store %arg12[%c32_63, %c0_64], %190 {strides = array<i32>} : memref<40x1xf32, #tpu.memory_space<vmem>>, vector<8x1xf32>,
    return
  }
}

</mosaic_0001>

<llo_original>
// kernel: tpa_cnn_lstm_forward.1
$region0: #{tpa_cnn_lstm_forward.1}
  #allocation0 [shape = 'u32[]', space=smem, size = 0x4, offset = 0x4, fixed_abs, tag = 'smem constant byte address 0x4 - core index']
  #allocation1 [shape = 'u32[72,128]{1,0:T(1,128)}', space=vmem, size = 0x9000, scoped, tag = 'internal scratch']
  #allocation2 [shape = 'f32[40,128]{1,0:T(8,128)}', space=vmem, size = 0x5000, scoped, tag = 'scratch operand']
  #allocation3 [shape = 'f32[1,1]{1,0:T(1,128)S(1)}', space=vmem, size = 0x200, scoped, tag = 'scoped memory for tpa_cnn_lstm_forward.1']
  #allocation4 [shape = 'f32[1,1]{1,0:T(1,128)S(1)}', space=vmem, size = 0x200, scoped, tag = 'scoped memory for tpa_cnn_lstm_forward.1']
  %s0 = inlined_call_operand.vmem [shape: f32[80,8], index: 0, kind: input, shape index: {}]
  %s1 = inlined_call_operand.vmem [shape: f32[8,64], index: 1, kind: input, shape index: {}]
  %s2 = inlined_call_operand.vmem [shape: f32[1,64], index: 2, kind: input, shape index: {}]
  %s3 = inlined_call_operand.vmem [shape: f32[64,512], index: 3, kind: input, shape index: {}]
  %s4 = inlined_call_operand.hbm [shape: f32[128,512], index: 4, kind: input, shape index: {}]
  %s5 = inlined_call_operand.vmem [shape: f32[1,512], index: 5, kind: input, shape index: {}]
  %s6 = inlined_call_operand.vmem [shape: f32[128,128], index: 6, kind: input, shape index: {}]
  %s7 = inlined_call_operand.vmem [shape: f32[1,128], index: 7, kind: input, shape index: {}]
  %s8 = inlined_call_operand.vmem [shape: f32[1,64], index: 8, kind: input, shape index: {}]
  %s9 = inlined_call_operand.<no memory space> [shape: f32[1,1], index: 9, kind: input, shape index: {}]
  %s10 = inlined_call_operand.vmem [shape: f32[128,1], index: 10, kind: input, shape index: {}]
  %s11 = inlined_call_operand.<no memory space> [shape: f32[1,1], index: 11, kind: input, shape index: {}]
  %s12 = inlined_call_operand.vmem [shape: f32[40,1], index: 12, kind: output, shape index: {}]
  %s13 = sld [smem:[#allocation0]]
  $region62: #{tpa_cnn_lstm_forward.1} parent=0
    _
  %s15 = ssub.s32 1, %s13
  %s16 = scalar_select 0, %s15, %s13
  %v17 = vstv %s9
  %18 = vst [vmem:[#allocation3] sm:$0x1] %v17
  %v19 = vstv %s11
  %20 = vst [vmem:[#allocation4] sm:$0x1] %v19
  $region1: #{tpa_cnn_lstm_forward.1} parent=0
    #allocation5 [shape = 'u8[262144]{0}', space=vmem, size = 0x40000, scoped, tag = 'input window, operand 4, single buffered']
    #allocation6 [shape = 's32[1]{0}', space=sflag, size = 0x4, scoped, tag = 'scoped memory for tpa_cnn_lstm_forward.1']
    %21 = vsyncpa [#allocation6], 0
    // Predicated region
    $region2: #{tpa_cnn_lstm_forward.1} parent=1 // pred_check
      _
    $region3: #{tpa_cnn_lstm_forward.1} parent=1 // pred_check_branch
      %23 = sbr.rel (0) target = $region5
    $region4: #{tpa_cnn_lstm_forward.1} parent=1 // pred_region
      _
    $region5: #{tpa_cnn_lstm_forward.1} parent=1 // pred_fallthru
      _
    // Predicated region
    $region6: #{tpa_cnn_lstm_forward.1} parent=1 // pred_check
      _
    $region7: #{tpa_cnn_lstm_forward.1} parent=1 // pred_check_branch
      %25 = sbr.rel (0) target = $region9
    $region8: #{tpa_cnn_lstm_forward.1} parent=1 // pred_region
      _
    $region9: #{tpa_cnn_lstm_forward.1} parent=1 // pred_fallthru
      _
    // Predicated region
    $region10: #{tpa_cnn_lstm_forward.1} parent=1 // pred_check
      _
    $region11: #{tpa_cnn_lstm_forward.1} parent=1 // pred_check_branch
      %27 = sbr.rel (0) target = $region13
    $region12: #{tpa_cnn_lstm_forward.1} parent=1 // pred_region
      _
    $region13: #{tpa_cnn_lstm_forward.1} parent=1 // pred_fallthru
      _
    // Predicated region
    $region14: #{tpa_cnn_lstm_forward.1} parent=1 // pred_check
      _
    $region15: #{tpa_cnn_lstm_forward.1} parent=1 // pred_check_branch
      %29 = sbr.rel (0) target = $region17
    $region16: #{tpa_cnn_lstm_forward.1} parent=1 // pred_region
      _
    $region17: #{tpa_cnn_lstm_forward.1} parent=1 // pred_fallthru
      _
    // Predicated region
    $region18: #{tpa_cnn_lstm_forward.1} parent=1 // pred_check
      _
    $region19: #{tpa_cnn_lstm_forward.1} parent=1 // pred_check_branch
      %31 = sbr.rel (0) target = $region21
    $region20: #{tpa_cnn_lstm_forward.1} parent=1 // pred_region
      %33 = vsyncadd [#allocation6], 0
      %s34 = sshll.u32 %s4, 4
      %s35 = int_to_ptr.hbm [resolvable:$true] %s34
      %s36 = sshll.u32 [#allocation5], 4
      %s37 = int_to_ptr.vmem [resolvable:$true] %s36
      %42 = dma.hbm_to_vmem [thread:$0]  %s35, 8192, %s37, [#allocation6], 512, 512, 32
    $region21: #{tpa_cnn_lstm_forward.1} parent=1 // pred_fallthru
      _
    // Predicated region
    $region22: #{tpa_cnn_lstm_forward.1} parent=1 // pred_check
      _
    $region23: #{tpa_cnn_lstm_forward.1} parent=1 // pred_check_branch
      %44 = sbr.rel (0) target = $region25
    $region24: #{tpa_cnn_lstm_forward.1} parent=1 // pred_region
      _
    $region25: #{tpa_cnn_lstm_forward.1} parent=1 // pred_fallthru
      _
    // Predicated region
    $region26: #{tpa_cnn_lstm_forward.1} parent=1 // pred_check
      _
    $region27: #{tpa_cnn_lstm_forward.1} parent=1 // pred_check_branch
      %46 = sbr.rel (0) target = $region29
    $region28: #{tpa_cnn_lstm_forward.1} parent=1 // pred_region
      _
    $region29: #{tpa_cnn_lstm_forward.1} parent=1 // pred_fallthru
      _
    // Predicated region
    $region30: #{tpa_cnn_lstm_forward.1} parent=1 // pred_check
      _
    $region31: #{tpa_cnn_lstm_forward.1} parent=1 // pred_check_branch
      %48 = sbr.rel (0) target = $region33
    $region32: #{tpa_cnn_lstm_forward.1} parent=1 // pred_region
      _
    $region33: #{tpa_cnn_lstm_forward.1} parent=1 // pred_fallthru
      _
    // Predicated region
    $region34: #{tpa_cnn_lstm_forward.1} parent=1 // pred_check
      _
    $region35: #{tpa_cnn_lstm_forward.1} parent=1 // pred_check_branch
      %50 = sbr.rel (0) target = $region37
    $region36: #{tpa_cnn_lstm_forward.1} parent=1 // pred_region
      _
    $region37: #{tpa_cnn_lstm_forward.1} parent=1 // pred_fallthru
      _
    // Predicated region
    $region38: #{tpa_cnn_lstm_forward.1} parent=1 // pred_check
      _
    $region39: #{tpa_cnn_lstm_forward.1} parent=1 // pred_check_branch
      %52 = sbr.rel (0) target = $region41
    $region40: #{tpa_cnn_lstm_forward.1} parent=1 // pred_region
      _
    $region41: #{tpa_cnn_lstm_forward.1} parent=1 // pred_fallthru
      _
    // Predicated region
    $region42: #{tpa_cnn_lstm_forward.1} parent=1 // pred_check
      _
    $region43: #{tpa_cnn_lstm_forward.1} parent=1 // pred_check_branch
      %54 = sbr.rel (0) target = $region45
    $region44: #{tpa_cnn_lstm_forward.1} parent=1 // pred_region
      _
    $region45: #{tpa_cnn_lstm_forward.1} parent=1 // pred_fallthru
      _
    // Predicated region
    $region46: #{tpa_cnn_lstm_forward.1} parent=1 // pred_check
      _
    $region47: #{tpa_cnn_lstm_forward.1} parent=1 // pred_check_branch
      %56 = sbr.rel (0) target = $region49
    $region48: #{tpa_cnn_lstm_forward.1} parent=1 // pred_region
      _
    $region49: #{tpa_cnn_lstm_forward.1} parent=1 // pred_fallthru
      _
    // Predicated region
    $region50: #{tpa_cnn_lstm_forward.1} parent=1 // pred_check
      _
    $region51: #{tpa_cnn_lstm_forward.1} parent=1 // pred_check_branch
      %58 = sbr.rel (0) target = $region53
    $region52: #{tpa_cnn_lstm_forward.1} parent=1 // pred_region
      %60 = dma.done [#allocation6], 8192
    $region53: #{tpa_cnn_lstm_forward.1} parent=1 // pred_fallthru
      _
    %v61 = vld [vmem:[%s0] sm:$0xff]
    %v62 = vld [vmem:[%s0 + $0x8] sm:$0xff]
    %v63 = vld [vmem:[%s0 + $0x10] sm:$0xff]
    %v64 = vld [vmem:[%s0 + $0x18] sm:$0xff]
    %v65 = vld [vmem:[%s0 + $0x20] sm:$0xff]
    %v66 = vld [vmem:[%s0 + $0x28] sm:$0xff]
    %v67 = vld [vmem:[%s0 + $0x30] sm:$0xff]
    %v68 = vld [vmem:[%s0 + $0x38] sm:$0xff]
    %v69 = vld [vmem:[%s0 + $0x40] sm:$0xff]
    %v70 = vld [vmem:[%s0 + $0x48] sm:$0xff]
    %v71 = vld [vmem:[%s1] sm:$0xff]
    %v72 = vld [vmem:[%s2] sm:$0x1]
    %v74 = vperm.slane %v72, 0
    %vm76 = vcmask 64512
    %v78 = vsel %vm76, %v61, 0
    %v81 = vsel %vm76, %v62, 0
    %v84 = vsel %vm76, %v63, 0
    %v87 = vsel %vm76, %v64, 0
    %v90 = vsel %vm76, %v65, 0
    %v93 = vsel %vm76, %v66, 0
    %v96 = vsel %vm76, %v67, 0
    %v99 = vsel %vm76, %v68, 0
    %v102 = vsel %vm76, %v69, 0
    %v105 = vsel %vm76, %v70, 0
    %107 = vmatpush.msra.mxu0 0.0
    %108 = vmatpush.msra.mxu0 0.0
    %109 = vmatpush.msra.mxu0 0.0
    %110 = vmatpush.msra.mxu0 0.0
    %111 = vmatpush.msra.mxu0 0.0
    %112 = vmatpush.msra.mxu0 0.0
    %113 = vmatpush.msra.mxu0 0.0
    %114 = vmatpush.msra.mxu0 0.0
    %115 = vmatpush.msra.mxu0 0.0
    %116 = vmatpush.msra.mxu0 0.0
    %117 = vmatpush.msra.mxu0 0.0
    %118 = vmatpush.msra.mxu0 0.0
    %119 = vmatpush.msra.mxu0 0.0
    %120 = vmatpush.msra.mxu0 0.0
    %121 = vmatpush.msra.mxu0 0.0
    %122 = vmatpush.msra.mxu0 %v71
    %123 = vmatmul.f32.gmra.mxu0 %v78
    %v124 = vpop.f32.mrf.mxu0
    %v125 = vadd.f32 %v74, %v124
    %126 = vmatmul.f32.gmra.mxu0 %v81
    %v127 = vpop.f32.mrf.mxu0
    %v128 = vadd.f32 %v74, %v127
    %129 = vmatmul.f32.gmra.mxu0 %v84
    %v130 = vpop.f32.mrf.mxu0
    %v131 = vadd.f32 %v74, %v130
    %132 = vmatmul.f32.gmra.mxu0 %v87
    %v133 = vpop.f32.mrf.mxu0
    %v134 = vadd.f32 %v74, %v133
    %135 = vmatmul.f32.gmra.mxu0 %v90
    %v136 = vpop.f32.mrf.mxu0
    %v137 = vadd.f32 %v74, %v136
    %138 = vmatmul.f32.gmra.mxu0 %v93
    %v139 = vpop.f32.mrf.mxu0
    %v140 = vadd.f32 %v74, %v139
    %141 = vmatmul.f32.gmra.mxu0 %v96
    %v142 = vpop.f32.mrf.mxu0
    %v143 = vadd.f32 %v74, %v142
    %144 = vmatmul.f32.gmra.mxu0 %v99
    %v145 = vpop.f32.mrf.mxu0
    %v146 = vadd.f32 %v74, %v145
    %147 = vmatmul.f32.gmra.mxu0 %v102
    %v148 = vpop.f32.mrf.mxu0
    %v149 = vadd.f32 %v74, %v148
    %150 = vmatmul.f32.gmra.mxu0 %v105
    %v151 = vpop.f32.mrf.mxu0
    %v152 = vadd.f32 %v74, %v151
    %153 = vdwg.mxu0
    %v154 = vmax.f32 %v125, 0.0
    %v155 = vmax.f32 %v128, 0.0
    %v156 = vmax.f32 %v131, 0.0
    %v157 = vmax.f32 %v134, 0.0
    %v158 = vmax.f32 %v137, 0.0
    %v159 = vmax.f32 %v140, 0.0
    %v160 = vmax.f32 %v143, 0.0
    %v161 = vmax.f32 %v146, 0.0
    %v162 = vmax.f32 %v149, 0.0
    %v163 = vmax.f32 %v152, 0.0
    %v164 = vmax.f32 %v154, %v159
    %v165 = vmax.f32 %v155, %v160
    %v166 = vmax.f32 %v156, %v161
    %v167 = vmax.f32 %v157, %v162
    %v168 = vmax.f32 %v158, %v163
    %v169 = vld [vmem:[%s3] sm:$0xff]
    %v170 = vld [vmem:[%s3 + $0x8] sm:$0xff]
    %v171 = vld [vmem:[%s3 + $0x10] sm:$0xff]
    %v172 = vld [vmem:[%s3 + $0x18] sm:$0xff]
    %v173 = vld [vmem:[%s3 + $0x20] sm:$0xff]
    %v174 = vld [vmem:[%s3 + $0x28] sm:$0xff]
    %v175 = vld [vmem:[%s3 + $0x30] sm:$0xff]
    %v176 = vld [vmem:[%s3 + $0x38] sm:$0xff]
    %v177 = vld [vmem:[%s3 + $0x40] sm:$0xff]
    %v178 = vld [vmem:[%s3 + $0x48] sm:$0xff]
    %v179 = vld [vmem:[%s3 + $0x50] sm:$0xff]
    %v180 = vld [vmem:[%s3 + $0x58] sm:$0xff]
    %v181 = vld [vmem:[%s3 + $0x60] sm:$0xff]
    %v182 = vld [vmem:[%s3 + $0x68] sm:$0xff]
    %v183 = vld [vmem:[%s3 + $0x70] sm:$0xff]
    %v184 = vld [vmem:[%s3 + $0x78] sm:$0xff]
    %v185 = vld [vmem:[%s3 + $0x80] sm:$0xff]
    %v186 = vld [vmem:[%s3 + $0x88] sm:$0xff]
    %v187 = vld [vmem:[%s3 + $0x90] sm:$0xff]
    %v188 = vld [vmem:[%s3 + $0x98] sm:$0xff]
    %v189 = vld [vmem:[%s3 + $0xa0] sm:$0xff]
    %v190 = vld [vmem:[%s3 + $0xa8] sm:$0xff]
    %v191 = vld [vmem:[%s3 + $0xb0] sm:$0xff]
    %v192 = vld [vmem:[%s3 + $0xb8] sm:$0xff]
    %v193 = vld [vmem:[%s3 + $0xc0] sm:$0xff]
    %v194 = vld [vmem:[%s3 + $0xc8] sm:$0xff]
    %v195 = vld [vmem:[%s3 + $0xd0] sm:$0xff]
    %v196 = vld [vmem:[%s3 + $0xd8] sm:$0xff]
    %v197 = vld [vmem:[%s3 + $0xe0] sm:$0xff]
    %v198 = vld [vmem:[%s3 + $0xe8] sm:$0xff]
    %v199 = vld [vmem:[%s3 + $0xf0] sm:$0xff]
    %v200 = vld [vmem:[%s3 + $0xf8] sm:$0xff]
    %v201 = vld [vmem:[%s5] sm:$0xf]
    %v203 = vperm.slane %v201, 0
    %v204 = vperm.slane %v201, 1
    %v205 = vperm.slane %v201, 2
    %v206 = vperm.slane %v201, 3
    %vm211 = vcmask 523264
    %v213 = vsel %vm211, %v164, 0
    %v216 = vsel %vm211, %v165, 0
    %v219 = vsel %vm211, %v166, 0
    %v222 = vsel %vm211, %v167, 0
    %v225 = vsel %vm211, %v168, 0
    %227 = vmatpush.msra.mxu0 0.0
    %228 = vmatpush.msra.mxu0 0.0
    %229 = vmatpush.msra.mxu0 0.0
    %230 = vmatpush.msra.mxu0 0.0
    %231 = vmatpush.msra.mxu0 0.0
    %232 = vmatpush.msra.mxu0 0.0
    %233 = vmatpush.msra.mxu0 0.0
    %234 = vmatpush.msra.mxu0 0.0
    %235 = vmatpush.msra.mxu0 %v197
    %236 = vmatpush.msra.mxu0 %v193
    %237 = vmatpush.msra.mxu0 %v189
    %238 = vmatpush.msra.mxu0 %v185
    %239 = vmatpush.msra.mxu0 %v181
    %240 = vmatpush.msra.mxu0 %v177
    %241 = vmatpush.msra.mxu0 %v173
    %242 = vmatpush.msra.mxu0 %v169
    %243 = vmatmul.f32.gmra.mxu0 %v213
    %v244 = vpop.f32.mrf.mxu0
    %v245 = vadd.f32 %v203, %v244
    %246 = vmatmul.f32.gmra.mxu0 %v216
    %v247 = vpop.f32.mrf.mxu0
    %v248 = vadd.f32 %v203, %v247
    %249 = vmatmul.f32.gmra.mxu0 %v219
    %v250 = vpop.f32.mrf.mxu0
    %v251 = vadd.f32 %v203, %v250
    %252 = vmatmul.f32.gmra.mxu0 %v222
    %v253 = vpop.f32.mrf.mxu0
    %v254 = vadd.f32 %v203, %v253
    %255 = vmatmul.f32.gmra.mxu0 %v225
    %v256 = vpop.f32.mrf.mxu0
    %v257 = vadd.f32 %v203, %v256
    %258 = vdwg.mxu0
    %259 = vmatpush.msra.mxu0 0.0
    %260 = vmatpush.msra.mxu0 0.0
    %261 = vmatpush.msra.mxu0 0.0
    %262 = vmatpush.msra.mxu0 0.0
    %263 = vmatpush.msra.mxu0 0.0
    %264 = vmatpush.msra.mxu0 0.0
    %265 = vmatpush.msra.mxu0 0.0
    %266 = vmatpush.msra.mxu0 0.0
    %267 = vmatpush.msra.mxu0 %v198
    %268 = vmatpush.msra.mxu0 %v194
    %269 = vmatpush.msra.mxu0 %v190
    %270 = vmatpush.msra.mxu0 %v186
    %271 = vmatpush.msra.mxu0 %v182
    %272 = vmatpush.msra.mxu0 %v178
    %273 = vmatpush.msra.mxu0 %v174
    %274 = vmatpush.msra.mxu0 %v170
    %275 = vmatmul.f32.gmra.mxu0 %v213
    %v276 = vpop.f32.mrf.mxu0
    %v277 = vadd.f32 %v204, %v276
    %278 = vmatmul.f32.gmra.mxu0 %v216
    %v279 = vpop.f32.mrf.mxu0
    %v280 = vadd.f32 %v204, %v279
    %281 = vmatmul.f32.gmra.mxu0 %v219
    %v282 = vpop.f32.mrf.mxu0
    %v283 = vadd.f32 %v204, %v282
    %284 = vmatmul.f32.gmra.mxu0 %v222
    %v285 = vpop.f32.mrf.mxu0
    %v286 = vadd.f32 %v204, %v285
    %287 = vmatmul.f32.gmra.mxu0 %v225
    %v288 = vpop.f32.mrf.mxu0
    %v289 = vadd.f32 %v204, %v288
    %290 = vdwg.mxu0
    %291 = vmatpush.msra.mxu0 0.0
    %292 = vmatpush.msra.mxu0 0.0
    %293 = vmatpush.msra.mxu0 0.0
    %294 = vmatpush.msra.mxu0 0.0
    %295 = vmatpush.msra.mxu0 0.0
    %296 = vmatpush.msra.mxu0 0.0
    %297 = vmatpush.msra.mxu0 0.0
    %298 = vmatpush.msra.mxu0 0.0
    %299 = vmatpush.msra.mxu0 %v199
    %300 = vmatpush.msra.mxu0 %v195
    %301 = vmatpush.msra.mxu0 %v191
    %302 = vmatpush.msra.mxu0 %v187
    %303 = vmatpush.msra.mxu0 %v183
    %304 = vmatpush.msra.mxu0 %v179
    %305 = vmatpush.msra.mxu0 %v175
    %306 = vmatpush.msra.mxu0 %v171
    %307 = vmatmul.f32.gmra.mxu0 %v213
    %v308 = vpop.f32.mrf.mxu0
    %v309 = vadd.f32 %v205, %v308
    %310 = vmatmul.f32.gmra.mxu0 %v216
    %v311 = vpop.f32.mrf.mxu0
    %v312 = vadd.f32 %v205, %v311
    %313 = vmatmul.f32.gmra.mxu0 %v219
    %v314 = vpop.f32.mrf.mxu0
    %v315 = vadd.f32 %v205, %v314
    %316 = vmatmul.f32.gmra.mxu0 %v222
    %v317 = vpop.f32.mrf.mxu0
    %v318 = vadd.f32 %v205, %v317
    %319 = vmatmul.f32.gmra.mxu0 %v225
    %v320 = vpop.f32.mrf.mxu0
    %v321 = vadd.f32 %v205, %v320
    %322 = vdwg.mxu0
    %323 = vmatpush.msra.mxu0 0.0
    %324 = vmatpush.msra.mxu0 0.0
    %325 = vmatpush.msra.mxu0 0.0
    %326 = vmatpush.msra.mxu0 0.0
    %327 = vmatpush.msra.mxu0 0.0
    %328 = vmatpush.msra.mxu0 0.0
    %329 = vmatpush.msra.mxu0 0.0
    %330 = vmatpush.msra.mxu0 0.0
    %331 = vmatpush.msra.mxu0 %v200
    %332 = vmatpush.msra.mxu0 %v196
    %333 = vmatpush.msra.mxu0 %v192
    %334 = vmatpush.msra.mxu0 %v188
    %335 = vmatpush.msra.mxu0 %v184
    %336 = vmatpush.msra.mxu0 %v180
    %337 = vmatpush.msra.mxu0 %v176
    %338 = vmatpush.msra.mxu0 %v172
    %339 = vmatmul.f32.gmra.mxu0 %v213
    %v340 = vpop.f32.mrf.mxu0
    %v341 = vadd.f32 %v206, %v340
    %342 = vmatmul.f32.gmra.mxu0 %v216
    %v343 = vpop.f32.mrf.mxu0
    %v344 = vadd.f32 %v206, %v343
    %345 = vmatmul.f32.gmra.mxu0 %v219
    %v346 = vpop.f32.mrf.mxu0
    %v347 = vadd.f32 %v206, %v346
    %348 = vmatmul.f32.gmra.mxu0 %v222
    %v349 = vpop.f32.mrf.mxu0
    %v350 = vadd.f32 %v206, %v349
    %351 = vmatmul.f32.gmra.mxu0 %v225
    %v352 = vpop.f32.mrf.mxu0
    %v353 = vadd.f32 %v206, %v352
    %354 = vdwg.mxu0
    %v355 = vld [vmem:[#allocation5] sm:$0xff]
    %v356 = vld [vmem:[#allocation5 + $0x8] sm:$0xff]
    %v357 = vld [vmem:[#allocation5 + $0x10] sm:$0xff]
    %v358 = vld [vmem:[#allocation5 + $0x18] sm:$0xff]
    %v359 = vld [vmem:[#allocation5 + $0x20] sm:$0xff]
    %v360 = vld [vmem:[#allocation5 + $0x28] sm:$0xff]
    %v361 = vld [vmem:[#allocation5 + $0x30] sm:$0xff]
    %v362 = vld [vmem:[#allocation5 + $0x38] sm:$0xff]
    %v363 = vld [vmem:[#allocation5 + $0x40] sm:$0xff]
    %v364 = vld [vmem:[#allocation5 + $0x48] sm:$0xff]
    %v365 = vld [vmem:[#allocation5 + $0x50] sm:$0xff]
    %v366 = vld [vmem:[#allocation5 + $0x58] sm:$0xff]
    %v367 = vld [vmem:[#allocation5 + $0x60] sm:$0xff]
    %v368 = vld [vmem:[#allocation5 + $0x68] sm:$0xff]
    %v369 = vld [vmem:[#allocation5 + $0x70] sm:$0xff]
    %v370 = vld [vmem:[#allocation5 + $0x78] sm:$0xff]
    %v371 = vld [vmem:[#allocation5 + $0x80] sm:$0xff]
    %v372 = vld [vmem:[#allocation5 + $0x88] sm:$0xff]
    %v373 = vld [vmem:[#allocation5 + $0x90] sm:$0xff]
    %v374 = vld [vmem:[#allocation5 + $0x98] sm:$0xff]
    %v375 = vld [vmem:[#allocation5 + $0xa0] sm:$0xff]
    %v376 = vld [vmem:[#allocation5 + $0xa8] sm:$0xff]
    %v377 = vld [vmem:[#allocation5 + $0xb0] sm:$0xff]
    %v378 = vld [vmem:[#allocation5 + $0xb8] sm:$0xff]
    %v379 = vld [vmem:[#allocation5 + $0xc0] sm:$0xff]
    %v380 = vld [vmem:[#allocation5 + $0xc8] sm:$0xff]
    %v381 = vld [vmem:[#allocation5 + $0xd0] sm:$0xff]
    %v382 = vld [vmem:[#allocation5 + $0xd8] sm:$0xff]
    %v383 = vld [vmem:[#allocation5 + $0xe0] sm:$0xff]
    %v384 = vld [vmem:[#allocation5 + $0xe8] sm:$0xff]
    %v385 = vld [vmem:[#allocation5 + $0xf0] sm:$0xff]
    %v386 = vld [vmem:[#allocation5 + $0xf8] sm:$0xff]
    %v387 = vld [vmem:[#allocation5 + $0x100] sm:$0xff]
    %v388 = vld [vmem:[#allocation5 + $0x108] sm:$0xff]
    %v389 = vld [vmem:[#allocation5 + $0x110] sm:$0xff]
    %v390 = vld [vmem:[#allocation5 + $0x118] sm:$0xff]
    %v391 = vld [vmem:[#allocation5 + $0x120] sm:$0xff]
    %v392 = vld [vmem:[#allocation5 + $0x128] sm:$0xff]
    %v393 = vld [vmem:[#allocation5 + $0x130] sm:$0xff]
    %v394 = vld [vmem:[#allocation5 + $0x138] sm:$0xff]
    %v395 = vld [vmem:[#allocation5 + $0x140] sm:$0xff]
    %v396 = vld [vmem:[#allocation5 + $0x148] sm:$0xff]
    %v397 = vld [vmem:[#allocation5 + $0x150] sm:$0xff]
    %v398 = vld [vmem:[#allocation5 + $0x158] sm:$0xff]
    %v399 = vld [vmem:[#allocation5 + $0x160] sm:$0xff]
    %v400 = vld [vmem:[#allocation5 + $0x168] sm:$0xff]
    %v401 = vld [vmem:[#allocation5 + $0x170] sm:$0xff]
    %v402 = vld [vmem:[#allocation5 + $0x178] sm:$0xff]
    %v403 = vld [vmem:[#allocation5 + $0x180] sm:$0xff]
    %v404 = vld [vmem:[#allocation5 + $0x188] sm:$0xff]
    %v405 = vld [vmem:[#allocation5 + $0x190] sm:$0xff]
    %v406 = vld [vmem:[#allocation5 + $0x198] sm:$0xff]
    %v407 = vld [vmem:[#allocation5 + $0x1a0] sm:$0xff]
    %v408 = vld [vmem:[#allocation5 + $0x1a8] sm:$0xff]
    %v409 = vld [vmem:[#allocation5 + $0x1b0] sm:$0xff]
    %v410 = vld [vmem:[#allocation5 + $0x1b8] sm:$0xff]
    %v411 = vld [vmem:[#allocation5 + $0x1c0] sm:$0xff]
    %v412 = vld [vmem:[#allocation5 + $0x1c8] sm:$0xff]
    %v413 = vld [vmem:[#allocation5 + $0x1d0] sm:$0xff]
    %v414 = vld [vmem:[#allocation5 + $0x1d8] sm:$0xff]
    %v415 = vld [vmem:[#allocation5 + $0x1e0] sm:$0xff]
    %v416 = vld [vmem:[#allocation5 + $0x1e8] sm:$0xff]
    %v417 = vld [vmem:[#allocation5 + $0x1f0] sm:$0xff]
    %v418 = vld [vmem:[#allocation5 + $0x1f8] sm:$0xff]
    %419 = vmatpush.msra.mxu0 %v415
    %420 = vmatpush.msra.mxu0 %v411
    %421 = vmatpush.msra.mxu0 %v407
    %422 = vmatpush.msra.mxu0 %v403
    %423 = vmatpush.msra.mxu0 %v399
    %424 = vmatpush.msra.mxu0 %v395
    %425 = vmatpush.msra.mxu0 %v391
    %426 = vmatpush.msra.mxu0 %v387
    %427 = vmatpush.msra.mxu0 %v383
    %428 = vmatpush.msra.mxu0 %v379
    %429 = vmatpush.msra.mxu0 %v375
    %430 = vmatpush.msra.mxu0 %v371
    %431 = vmatpush.msra.mxu0 %v367
    %432 = vmatpush.msra.mxu0 %v363
    %433 = vmatpush.msra.mxu0 %v359
    %434 = vmatpush.msra.mxu0 %v355
    %435 = vmatmul.f32.gmra.mxu0 0.0
    %v436 = vpop.f32.mrf.mxu0
    %v437 = vadd.f32 0.0, %v436
    %438 = vdwg.mxu0
    %439 = vmatpush.msra.mxu0 %v416
    %440 = vmatpush.msra.mxu0 %v412
    %441 = vmatpush.msra.mxu0 %v408
    %442 = vmatpush.msra.mxu0 %v404
    %443 = vmatpush.msra.mxu0 %v400
    %444 = vmatpush.msra.mxu0 %v396
    %445 = vmatpush.msra.mxu0 %v392
    %446 = vmatpush.msra.mxu0 %v388
    %447 = vmatpush.msra.mxu0 %v384
    %448 = vmatpush.msra.mxu0 %v380
    %449 = vmatpush.msra.mxu0 %v376
    %450 = vmatpush.msra.mxu0 %v372
    %451 = vmatpush.msra.mxu0 %v368
    %452 = vmatpush.msra.mxu0 %v364
    %453 = vmatpush.msra.mxu0 %v360
    %454 = vmatpush.msra.mxu0 %v356
    %455 = vmatmul.f32.gmra.mxu0 0.0
    %v456 = vpop.f32.mrf.mxu0
    %v457 = vadd.f32 0.0, %v456
    %458 = vdwg.mxu0
    %459 = vmatpush.msra.mxu0 %v417
    %460 = vmatpush.msra.mxu0 %v413
    %461 = vmatpush.msra.mxu0 %v409
    %462 = vmatpush.msra.mxu0 %v405
    %463 = vmatpush.msra.mxu0 %v401
    %464 = vmatpush.msra.mxu0 %v397
    %465 = vmatpush.msra.mxu0 %v393
    %466 = vmatpush.msra.mxu0 %v389
    %467 = vmatpush.msra.mxu0 %v385
    %468 = vmatpush.msra.mxu0 %v381
    %469 = vmatpush.msra.mxu0 %v377
    %470 = vmatpush.msra.mxu0 %v373
    %471 = vmatpush.msra.mxu0 %v369
    %472 = vmatpush.msra.mxu0 %v365
    %473 = vmatpush.msra.mxu0 %v361
    %474 = vmatpush.msra.mxu0 %v357
    %475 = vmatmul.f32.gmra.mxu0 0.0
    %v476 = vpop.f32.mrf.mxu0
    %v477 = vadd.f32 0.0, %v476
    %478 = vdwg.mxu0
    %479 = vmatpush.msra.mxu0 %v418
    %480 = vmatpush.msra.mxu0 %v414
    %481 = vmatpush.msra.mxu0 %v410
    %482 = vmatpush.msra.mxu0 %v406
    %483 = vmatpush.msra.mxu0 %v402
    %484 = vmatpush.msra.mxu0 %v398
    %485 = vmatpush.msra.mxu0 %v394
    %486 = vmatpush.msra.mxu0 %v390
    %487 = vmatpush.msra.mxu0 %v386
    %488 = vmatpush.msra.mxu0 %v382
    %489 = vmatpush.msra.mxu0 %v378
    %490 = vmatpush.msra.mxu0 %v374
    %491 = vmatpush.msra.mxu0 %v370
    %492 = vmatpush.msra.mxu0 %v366
    %493 = vmatpush.msra.mxu0 %v362
    %494 = vmatpush.msra.mxu0 %v358
    %495 = vmatmul.f32.gmra.mxu0 0.0
    %v496 = vpop.f32.mrf.mxu0
    %v497 = vadd.f32 0.0, %v496
    %498 = vdwg.mxu0
    %v499 = vadd.f32 %v245, %v437
    %v500 = vadd.f32 %v277, %v457
    %v501 = vadd.f32 %v309, %v477
    %v502 = vadd.f32 %v341, %v497
    %v503 = vxor.u32 %v499, 2147483648
    %v504 = vxor.u32 %v500, 2147483648
    %v505 = vxor.u32 %v501, 2147483648
    %v506 = vmul.f32 %v503, 1.442695
    %v507 = vpow.pop %v506
    %v508 = vmul.f32 %v504, 1.442695
    %v509 = vpow.pop %v508
    %v510 = vmul.f32 %v505, 1.442695
    %v511 = vpow.pop %v510
    %v512 = vadd.f32 %v507, 1.0
    %v513 = vadd.f32 %v509, 1.0
    %v514 = vadd.f32 %v511, 1.0
    %v515 = vrcp.pop %v512
    %v516 = vmul.f32 %v512, %v515
    %v517 = vsub.f32 1.0, %v516
    %v518 = vmul.f32 %v515, %v517
    %v519 = vadd.f32 %v515, %v518
    %vm520 = vweird.f32 %v512
    %vm521 = vweird.f32 %v515
    %vm522 = vmor %vm520, %vm521
    %v523 = vsel %vm522, %v515, %v519
    %v524 = vand.u32 2147483647, %v512
    %vm525 = vcmp.eq.f32.partialorder %v524, 8.507059e+37
    %v526 = vand.u32 %v512, 2147483648
    %v527 = vor.u32 1.1754944e-38, %v526
    %v528 = vsel %vm525, %v527, %v523
    %v529 = vmul.f32 1.0, %v528
    %v530 = vrcp.pop %v513
    %v531 = vmul.f32 %v513, %v530
    %v532 = vsub.f32 1.0, %v531
    %v533 = vmul.f32 %v530, %v532
    %v534 = vadd.f32 %v530, %v533
    %vm535 = vweird.f32 %v513
    %vm536 = vweird.f32 %v530
    %vm537 = vmor %vm535, %vm536
    %v538 = vsel %vm537, %v530, %v534
    %v539 = vand.u32 2147483647, %v513
    %vm540 = vcmp.eq.f32.partialorder %v539, 8.507059e+37
    %v541 = vand.u32 %v513, 2147483648
    %v542 = vor.u32 1.1754944e-38, %v541
    %v543 = vsel %vm540, %v542, %v538
    %v544 = vmul.f32 1.0, %v543
    %v545 = vrcp.pop %v514
    %v546 = vmul.f32 %v514, %v545
    %v547 = vsub.f32 1.0, %v546
    %v548 = vmul.f32 %v545, %v547
    %v549 = vadd.f32 %v545, %v548
    %vm550 = vweird.f32 %v514
    %vm551 = vweird.f32 %v545
    %vm552 = vmor %vm550, %vm551
    %v553 = vsel %vm552, %v545, %v549
    %v554 = vand.u32 2147483647, %v514
    %vm555 = vcmp.eq.f32.partialorder %v554, 8.507059e+37
    %v556 = vand.u32 %v514, 2147483648
    %v557 = vor.u32 1.1754944e-38, %v556
    %v558 = vsel %vm555, %v557, %v553
    %v559 = vmul.f32 1.0, %v558
    %v560 = vtanh.pop %v502
    %v561 = vmul.f32 %v544, 0.0
    %v562 = vmul.f32 %v529, %v560
    %v563 = vadd.f32 %v561, %v562
    %v564 = vtanh.pop %v563
    %v565 = vmul.f32 %v559, %v564
    %566 = vst [vmem:[#allocation2] sm:$0xff] %v565
    %567 = vmatpush.msra.mxu0 %v415
    %568 = vmatpush.msra.mxu0 %v411
    %569 = vmatpush.msra.mxu0 %v407
    %570 = vmatpush.msra.mxu0 %v403
    %571 = vmatpush.msra.mxu0 %v399
    %572 = vmatpush.msra.mxu0 %v395
    %573 = vmatpush.msra.mxu0 %v391
    %574 = vmatpush.msra.mxu0 %v387
    %575 = vmatpush.msra.mxu0 %v383
    %576 = vmatpush.msra.mxu0 %v379
    %577 = vmatpush.msra.mxu0 %v375
    %578 = vmatpush.msra.mxu0 %v371
    %579 = vmatpush.msra.mxu0 %v367
    %580 = vmatpush.msra.mxu0 %v363
    %581 = vmatpush.msra.mxu0 %v359
    %582 = vmatpush.msra.mxu0 %v355
    %583 = vmatmul.f32.gmra.mxu0 %v565
    %v584 = vpop.f32.mrf.mxu0
    %v585 = vadd.f32 0.0, %v584
    %586 = vdwg.mxu0
    %587 = vmatpush.msra.mxu0 %v416
    %588 = vmatpush.msra.mxu0 %v412
    %589 = vmatpush.msra.mxu0 %v408
    %590 = vmatpush.msra.mxu0 %v404
    %591 = vmatpush.msra.mxu0 %v400
    %592 = vmatpush.msra.mxu0 %v396
    %593 = vmatpush.msra.mxu0 %v392
    %594 = vmatpush.msra.mxu0 %v388
    %595 = vmatpush.msra.mxu0 %v384
    %596 = vmatpush.msra.mxu0 %v380
    %597 = vmatpush.msra.mxu0 %v376
    %598 = vmatpush.msra.mxu0 %v372
    %599 = vmatpush.msra.mxu0 %v368
    %600 = vmatpush.msra.mxu0 %v364
    %601 = vmatpush.msra.mxu0 %v360
    %602 = vmatpush.msra.mxu0 %v356
    %603 = vmatmul.f32.gmra.mxu0 %v565
    %v604 = vpop.f32.mrf.mxu0
    %v605 = vadd.f32 0.0, %v604
    %606 = vdwg.mxu0
    %607 = vmatpush.msra.mxu0 %v417
    %608 = vmatpush.msra.mxu0 %v413
    %609 = vmatpush.msra.mxu0 %v409
    %610 = vmatpush.msra.mxu0 %v405
    %611 = vmatpush.msra.mxu0 %v401
    %612 = vmatpush.msra.mxu0 %v397
    %613 = vmatpush.msra.mxu0 %v393
    %614 = vmatpush.msra.mxu0 %v389
    %615 = vmatpush.msra.mxu0 %v385
    %616 = vmatpush.msra.mxu0 %v381
    %617 = vmatpush.msra.mxu0 %v377
    %618 = vmatpush.msra.mxu0 %v373
    %619 = vmatpush.msra.mxu0 %v369
    %620 = vmatpush.msra.mxu0 %v365
    %621 = vmatpush.msra.mxu0 %v361
    %622 = vmatpush.msra.mxu0 %v357
    %623 = vmatmul.f32.gmra.mxu0 %v565
    %v624 = vpop.f32.mrf.mxu0
    %v625 = vadd.f32 0.0, %v624
    %626 = vdwg.mxu0
    %627 = vmatpush.msra.mxu0 %v418
    %628 = vmatpush.msra.mxu0 %v414
    %629 = vmatpush.msra.mxu0 %v410
    %630 = vmatpush.msra.mxu0 %v406
    %631 = vmatpush.msra.mxu0 %v402
    %632 = vmatpush.msra.mxu0 %v398
    %633 = vmatpush.msra.mxu0 %v394
    %634 = vmatpush.msra.mxu0 %v390
    %635 = vmatpush.msra.mxu0 %v386
    %636 = vmatpush.msra.mxu0 %v382
    %637 = vmatpush.msra.mxu0 %v378
    %638 = vmatpush.msra.mxu0 %v374
    %639 = vmatpush.msra.mxu0 %v370
    %640 = vmatpush.msra.mxu0 %v366
    %641 = vmatpush.msra.mxu0 %v362
    %642 = vmatpush.msra.mxu0 %v358
    %643 = vmatmul.f32.gmra.mxu0 %v565
    %v644 = vpop.f32.mrf.mxu0
    %v645 = vadd.f32 0.0, %v644
    %646 = vdwg.mxu0
    %v647 = vadd.f32 %v248, %v585
    %v648 = vadd.f32 %v280, %v605
    %v649 = vadd.f32 %v312, %v625
    %v650 = vadd.f32 %v344, %v645
    %v651 = vxor.u32 %v647, 2147483648
    %v652 = vxor.u32 %v648, 2147483648
    %v653 = vxor.u32 %v649, 2147483648
    %v654 = vmul.f32 %v651, 1.442695
    %v655 = vpow.pop %v654
    %v656 = vmul.f32 %v652, 1.442695
    %v657 = vpow.pop %v656
    %v658 = vmul.f32 %v653, 1.442695
    %v659 = vpow.pop %v658
    %v660 = vadd.f32 %v655, 1.0
    %v661 = vadd.f32 %v657, 1.0
    %v662 = vadd.f32 %v659, 1.0
    %v663 = vrcp.pop %v660
    %v664 = vmul.f32 %v660, %v663
    %v665 = vsub.f32 1.0, %v664
    %v666 = vmul.f32 %v663, %v665
    %v667 = vadd.f32 %v663, %v666
    %vm668 = vweird.f32 %v660
    %vm669 = vweird.f32 %v663
    %vm670 = vmor %vm668, %vm669
    %v671 = vsel %vm670, %v663, %v667
    %v672 = vand.u32 2147483647, %v660
    %vm673 = vcmp.eq.f32.partialorder %v672, 8.507059e+37
    %v674 = vand.u32 %v660, 2147483648
    %v675 = vor.u32 1.1754944e-38, %v674
    %v676 = vsel %vm673, %v675, %v671
    %v677 = vmul.f32 1.0, %v676
    %v678 = vrcp.pop %v661
    %v679 = vmul.f32 %v661, %v678
    %v680 = vsub.f32 1.0, %v679
    %v681 = vmul.f32 %v678, %v680
    %v682 = vadd.f32 %v678, %v681
    %vm683 = vweird.f32 %v661
    %vm684 = vweird.f32 %v678
    %vm685 = vmor %vm683, %vm684
    %v686 = vsel %vm685, %v678, %v682
    %v687 = vand.u32 2147483647, %v661
    %vm688 = vcmp.eq.f32.partialorder %v687, 8.507059e+37
    %v689 = vand.u32 %v661, 2147483648
    %v690 = vor.u32 1.1754944e-38, %v689
    %v691 = vsel %vm688, %v690, %v686
    %v692 = vmul.f32 1.0, %v691
    %v693 = vrcp.pop %v662
    %v694 = vmul.f32 %v662, %v693
    %v695 = vsub.f32 1.0, %v694
    %v696 = vmul.f32 %v693, %v695
    %v697 = vadd.f32 %v693, %v696
    %vm698 = vweird.f32 %v662
    %vm699 = vweird.f32 %v693
    %vm700 = vmor %vm698, %vm699
    %v701 = vsel %vm700, %v693, %v697
    %v702 = vand.u32 2147483647, %v662
    %vm703 = vcmp.eq.f32.partialorder %v702, 8.507059e+37
    %v704 = vand.u32 %v662, 2147483648
    %v705 = vor.u32 1.1754944e-38, %v704
    %v706 = vsel %vm703, %v705, %v701
    %v707 = vmul.f32 1.0, %v706
    %v708 = vtanh.pop %v650
    %v709 = vmul.f32 %v692, %v563
    %v710 = vmul.f32 %v677, %v708
    %v711 = vadd.f32 %v709, %v710
    %v712 = vtanh.pop %v711
    %v713 = vmul.f32 %v707, %v712
    %714 = vst [vmem:[#allocation2 + $0x8] sm:$0xff] %v713
    %715 = vmatpush.msra.mxu0 %v415
    %716 = vmatpush.msra.mxu0 %v411
    %717 = vmatpush.msra.mxu0 %v407
    %718 = vmatpush.msra.mxu0 %v403
    %719 = vmatpush.msra.mxu0 %v399
    %720 = vmatpush.msra.mxu0 %v395
    %721 = vmatpush.msra.mxu0 %v391
    %722 = vmatpush.msra.mxu0 %v387
    %723 = vmatpush.msra.mxu0 %v383
    %724 = vmatpush.msra.mxu0 %v379
    %725 = vmatpush.msra.mxu0 %v375
    %726 = vmatpush.msra.mxu0 %v371
    %727 = vmatpush.msra.mxu0 %v367
    %728 = vmatpush.msra.mxu0 %v363
    %729 = vmatpush.msra.mxu0 %v359
    %730 = vmatpush.msra.mxu0 %v355
    %731 = vmatmul.f32.gmra.mxu0 %v713
    %v732 = vpop.f32.mrf.mxu0
    %v733 = vadd.f32 0.0, %v732
    %734 = vdwg.mxu0
    %735 = vmatpush.msra.mxu0 %v416
    %736 = vmatpush.msra.mxu0 %v412
    %737 = vmatpush.msra.mxu0 %v408
    %738 = vmatpush.msra.mxu0 %v404
    %739 = vmatpush.msra.mxu0 %v400
    %740 = vmatpush.msra.mxu0 %v396
    %741 = vmatpush.msra.mxu0 %v392
    %742 = vmatpush.msra.mxu0 %v388
    %743 = vmatpush.msra.mxu0 %v384
    %744 = vmatpush.msra.mxu0 %v380
    %745 = vmatpush.msra.mxu0 %v376
    %746 = vmatpush.msra.mxu0 %v372
    %747 = vmatpush.msra.mxu0 %v368
    %748 = vmatpush.msra.mxu0 %v364
    %749 = vmatpush.msra.mxu0 %v360
    %750 = vmatpush.msra.mxu0 %v356
    %751 = vmatmul.f32.gmra.mxu0 %v713
    %v752 = vpop.f32.mrf.mxu0
    %v753 = vadd.f32 0.0, %v752
    %754 = vdwg.mxu0
    %755 = vmatpush.msra.mxu0 %v417
    %756 = vmatpush.msra.mxu0 %v413
    %757 = vmatpush.msra.mxu0 %v409
    %758 = vmatpush.msra.mxu0 %v405
    %759 = vmatpush.msra.mxu0 %v401
    %760 = vmatpush.msra.mxu0 %v397
    %761 = vmatpush.msra.mxu0 %v393
    %762 = vmatpush.msra.mxu0 %v389
    %763 = vmatpush.msra.mxu0 %v385
    %764 = vmatpush.msra.mxu0 %v381
    %765 = vmatpush.msra.mxu0 %v377
    %766 = vmatpush.msra.mxu0 %v373
    %767 = vmatpush.msra.mxu0 %v369
    %768 = vmatpush.msra.mxu0 %v365
    %769 = vmatpush.msra.mxu0 %v361
    %770 = vmatpush.msra.mxu0 %v357
    %771 = vmatmul.f32.gmra.mxu0 %v713
    %v772 = vpop.f32.mrf.mxu0
    %v773 = vadd.f32 0.0, %v772
    %774 = vdwg.mxu0
    %775 = vmatpush.msra.mxu0 %v418
    %776 = vmatpush.msra.mxu0 %v414
    %777 = vmatpush.msra.mxu0 %v410
    %778 = vmatpush.msra.mxu0 %v406
    %779 = vmatpush.msra.mxu0 %v402
    %780 = vmatpush.msra.mxu0 %v398
    %781 = vmatpush.msra.mxu0 %v394
    %782 = vmatpush.msra.mxu0 %v390
    %783 = vmatpush.msra.mxu0 %v386
    %784 = vmatpush.msra.mxu0 %v382
    %785 = vmatpush.msra.mxu0 %v378
    %786 = vmatpush.msra.mxu0 %v374
    %787 = vmatpush.msra.mxu0 %v370
    %788 = vmatpush.msra.mxu0 %v366
    %789 = vmatpush.msra.mxu0 %v362
    %790 = vmatpush.msra.mxu0 %v358
    %791 = vmatmul.f32.gmra.mxu0 %v713
    %v792 = vpop.f32.mrf.mxu0
    %v793 = vadd.f32 0.0, %v792
    %794 = vdwg.mxu0
    %v795 = vadd.f32 %v251, %v733
    %v796 = vadd.f32 %v283, %v753
    %v797 = vadd.f32 %v315, %v773
    %v798 = vadd.f32 %v347, %v793
    %v799 = vxor.u32 %v795, 2147483648
    %v800 = vxor.u32 %v796, 2147483648
    %v801 = vxor.u32 %v797, 2147483648
    %v802 = vmul.f32 %v799, 1.442695
    %v803 = vpow.pop %v802
    %v804 = vmul.f32 %v800, 1.442695
    %v805 = vpow.pop %v804
    %v806 = vmul.f32 %v801, 1.442695
    %v807 = vpow.pop %v806
    %v808 = vadd.f32 %v803, 1.0
    %v809 = vadd.f32 %v805, 1.0
    %v810 = vadd.f32 %v807, 1.0
    %v811 = vrcp.pop %v808
    %v812 = vmul.f32 %v808, %v811
    %v813 = vsub.f32 1.0, %v812
    %v814 = vmul.f32 %v811, %v813
    %v815 = vadd.f32 %v811, %v814
    %vm816 = vweird.f32 %v808
    %vm817 = vweird.f32 %v811
    %vm818 = vmor %vm816, %vm817
    %v819 = vsel %vm818, %v811, %v815
    %v820 = vand.u32 2147483647, %v808
    %vm821 = vcmp.eq.f32.partialorder %v820, 8.507059e+37
    %v822 = vand.u32 %v808, 2147483648
    %v823 = vor.u32 1.1754944e-38, %v822
    %v824 = vsel %vm821, %v823, %v819
    %v825 = vmul.f32 1.0, %v824
    %v826 = vrcp.pop %v809
    %v827 = vmul.f32 %v809, %v826
    %v828 = vsub.f32 1.0, %v827
    %v829 = vmul.f32 %v826, %v828
    %v830 = vadd.f32 %v826, %v829
    %vm831 = vweird.f32 %v809
    %vm832 = vweird.f32 %v826
    %vm833 = vmor %vm831, %vm832
    %v834 = vsel %vm833, %v826, %v830
    %v835 = vand.u32 2147483647, %v809
    %vm836 = vcmp.eq.f32.partialorder %v835, 8.507059e+37
    %v837 = vand.u32 %v809, 2147483648
    %v838 = vor.u32 1.1754944e-38, %v837
    %v839 = vsel %vm836, %v838, %v834
    %v840 = vmul.f32 1.0, %v839
    %v841 = vrcp.pop %v810
    %v842 = vmul.f32 %v810, %v841
    %v843 = vsub.f32 1.0, %v842
    %v844 = vmul.f32 %v841, %v843
    %v845 = vadd.f32 %v841, %v844
    %vm846 = vweird.f32 %v810
    %vm847 = vweird.f32 %v841
    %vm848 = vmor %vm846, %vm847
    %v849 = vsel %vm848, %v841, %v845
    %v850 = vand.u32 2147483647, %v810
    %vm851 = vcmp.eq.f32.partialorder %v850, 8.507059e+37
    %v852 = vand.u32 %v810, 2147483648
    %v853 = vor.u32 1.1754944e-38, %v852
    %v854 = vsel %vm851, %v853, %v849
    %v855 = vmul.f32 1.0, %v854
    %v856 = vtanh.pop %v798
    %v857 = vmul.f32 %v840, %v711
    %v858 = vmul.f32 %v825, %v856
    %v859 = vadd.f32 %v857, %v858
    %v860 = vtanh.pop %v859
    %v861 = vmul.f32 %v855, %v860
    %862 = vst [vmem:[#allocation2 + $0x10] sm:$0xff] %v861
    %863 = vmatpush.msra.mxu0 %v415
    %864 = vmatpush.msra.mxu0 %v411
    %865 = vmatpush.msra.mxu0 %v407
    %866 = vmatpush.msra.mxu0 %v403
    %867 = vmatpush.msra.mxu0 %v399
    %868 = vmatpush.msra.mxu0 %v395
    %869 = vmatpush.msra.mxu0 %v391
    %870 = vmatpush.msra.mxu0 %v387
    %871 = vmatpush.msra.mxu0 %v383
    %872 = vmatpush.msra.mxu0 %v379
    %873 = vmatpush.msra.mxu0 %v375
    %874 = vmatpush.msra.mxu0 %v371
    %875 = vmatpush.msra.mxu0 %v367
    %876 = vmatpush.msra.mxu0 %v363
    %877 = vmatpush.msra.mxu0 %v359
    %878 = vmatpush.msra.mxu0 %v355
    %879 = vmatmul.f32.gmra.mxu0 %v861
    %v880 = vpop.f32.mrf.mxu0
    %v881 = vadd.f32 0.0, %v880
    %882 = vdwg.mxu0
    %883 = vmatpush.msra.mxu0 %v416
    %884 = vmatpush.msra.mxu0 %v412
    %885 = vmatpush.msra.mxu0 %v408
    %886 = vmatpush.msra.mxu0 %v404
    %887 = vmatpush.msra.mxu0 %v400
    %888 = vmatpush.msra.mxu0 %v396
    %889 = vmatpush.msra.mxu0 %v392
    %890 = vmatpush.msra.mxu0 %v388
    %891 = vmatpush.msra.mxu0 %v384
    %892 = vmatpush.msra.mxu0 %v380
    %893 = vmatpush.msra.mxu0 %v376
    %894 = vmatpush.msra.mxu0 %v372
    %895 = vmatpush.msra.mxu0 %v368
    %896 = vmatpush.msra.mxu0 %v364
    %897 = vmatpush.msra.mxu0 %v360
    %898 = vmatpush.msra.mxu0 %v356
    %899 = vmatmul.f32.gmra.mxu0 %v861
    %v900 = vpop.f32.mrf.mxu0
    %v901 = vadd.f32 0.0, %v900
    %902 = vdwg.mxu0
    %903 = vmatpush.msra.mxu0 %v417
    %904 = vmatpush.msra.mxu0 %v413
    %905 = vmatpush.msra.mxu0 %v409
    %906 = vmatpush.msra.mxu0 %v405
    %907 = vmatpush.msra.mxu0 %v401
    %908 = vmatpush.msra.mxu0 %v397
    %909 = vmatpush.msra.mxu0 %v393
    %910 = vmatpush.msra.mxu0 %v389
    %911 = vmatpush.msra.mxu0 %v385
    %912 = vmatpush.msra.mxu0 %v381
    %913 = vmatpush.msra.mxu0 %v377
    %914 = vmatpush.msra.mxu0 %v373
    %915 = vmatpush.msra.mxu0 %v369
    %916 = vmatpush.msra.mxu0 %v365
    %917 = vmatpush.msra.mxu0 %v361
    %918 = vmatpush.msra.mxu0 %v357
    %919 = vmatmul.f32.gmra.mxu0 %v861
    %v920 = vpop.f32.mrf.mxu0
    %v921 = vadd.f32 0.0, %v920
    %922 = vdwg.mxu0
    %923 = vmatpush.msra.mxu0 %v418
    %924 = vmatpush.msra.mxu0 %v414
    %925 = vmatpush.msra.mxu0 %v410
    %926 = vmatpush.msra.mxu0 %v406
    %927 = vmatpush.msra.mxu0 %v402
    %928 = vmatpush.msra.mxu0 %v398
    %929 = vmatpush.msra.mxu0 %v394
    %930 = vmatpush.msra.mxu0 %v390
    %931 = vmatpush.msra.mxu0 %v386
    %932 = vmatpush.msra.mxu0 %v382
    %933 = vmatpush.msra.mxu0 %v378
    %934 = vmatpush.msra.mxu0 %v374
    %935 = vmatpush.msra.mxu0 %v370
    %936 = vmatpush.msra.mxu0 %v366
    %937 = vmatpush.msra.mxu0 %v362
    %938 = vmatpush.msra.mxu0 %v358
    %939 = vmatmul.f32.gmra.mxu0 %v861
    %v940 = vpop.f32.mrf.mxu0
    %v941 = vadd.f32 0.0, %v940
    %942 = vdwg.mxu0
    %v943 = vadd.f32 %v254, %v881
    %v944 = vadd.f32 %v286, %v901
    %v945 = vadd.f32 %v318, %v921
    %v946 = vadd.f32 %v350, %v941
    %v947 = vxor.u32 %v943, 2147483648
    %v948 = vxor.u32 %v944, 2147483648
    %v949 = vxor.u32 %v945, 2147483648
    %v950 = vmul.f32 %v947, 1.442695
    %v951 = vpow.pop %v950
    %v952 = vmul.f32 %v948, 1.442695
    %v953 = vpow.pop %v952
    %v954 = vmul.f32 %v949, 1.442695
    %v955 = vpow.pop %v954
    %v956 = vadd.f32 %v951, 1.0
    %v957 = vadd.f32 %v953, 1.0
    %v958 = vadd.f32 %v955, 1.0
    %v959 = vrcp.pop %v956
    %v960 = vmul.f32 %v956, %v959
    %v961 = vsub.f32 1.0, %v960
    %v962 = vmul.f32 %v959, %v961
    %v963 = vadd.f32 %v959, %v962
    %vm964 = vweird.f32 %v956
    %vm965 = vweird.f32 %v959
    %vm966 = vmor %vm964, %vm965
    %v967 = vsel %vm966, %v959, %v963
    %v968 = vand.u32 2147483647, %v956
    %vm969 = vcmp.eq.f32.partialorder %v968, 8.507059e+37
    %v970 = vand.u32 %v956, 2147483648
    %v971 = vor.u32 1.1754944e-38, %v970
    %v972 = vsel %vm969, %v971, %v967
    %v973 = vmul.f32 1.0, %v972
    %v974 = vrcp.pop %v957
    %v975 = vmul.f32 %v957, %v974
    %v976 = vsub.f32 1.0, %v975
    %v977 = vmul.f32 %v974, %v976
    %v978 = vadd.f32 %v974, %v977
    %vm979 = vweird.f32 %v957
    %vm980 = vweird.f32 %v974
    %vm981 = vmor %vm979, %vm980
    %v982 = vsel %vm981, %v974, %v978
    %v983 = vand.u32 2147483647, %v957
    %vm984 = vcmp.eq.f32.partialorder %v983, 8.507059e+37
    %v985 = vand.u32 %v957, 2147483648
    %v986 = vor.u32 1.1754944e-38, %v985
    %v987 = vsel %vm984, %v986, %v982
    %v988 = vmul.f32 1.0, %v987
    %v989 = vrcp.pop %v958
    %v990 = vmul.f32 %v958, %v989
    %v991 = vsub.f32 1.0, %v990
    %v992 = vmul.f32 %v989, %v991
    %v993 = vadd.f32 %v989, %v992
    %vm994 = vweird.f32 %v958
    %vm995 = vweird.f32 %v989
    %vm996 = vmor %vm994, %vm995
    %v997 = vsel %vm996, %v989, %v993
    %v998 = vand.u32 2147483647, %v958
    %vm999 = vcmp.eq.f32.partialorder %v998, 8.507059e+37
    %v1000 = vand.u32 %v958, 2147483648
    %v1001 = vor.u32 1.1754944e-38, %v1000
    %v1002 = vsel %vm999, %v1001, %v997
    %v1003 = vmul.f32 1.0, %v1002
    %v1004 = vtanh.pop %v946
    %v1005 = vmul.f32 %v988, %v859
    %v1006 = vmul.f32 %v973, %v1004
    %v1007 = vadd.f32 %v1005, %v1006
    %v1008 = vtanh.pop %v1007
    %v1009 = vmul.f32 %v1003, %v1008
    %1010 = vst [vmem:[#allocation2 + $0x18] sm:$0xff] %v1009
    %1011 = vmatpush.msra.mxu0 %v415
    %1012 = vmatpush.msra.mxu0 %v411
    %1013 = vmatpush.msra.mxu0 %v407
    %1014 = vmatpush.msra.mxu0 %v403
    %1015 = vmatpush.msra.mxu0 %v399
    %1016 = vmatpush.msra.mxu0 %v395
    %1017 = vmatpush.msra.mxu0 %v391
    %1018 = vmatpush.msra.mxu0 %v387
    %1019 = vmatpush.msra.mxu0 %v383
    %1020 = vmatpush.msra.mxu0 %v379
    %1021 = vmatpush.msra.mxu0 %v375
    %1022 = vmatpush.msra.mxu0 %v371
    %1023 = vmatpush.msra.mxu0 %v367
    %1024 = vmatpush.msra.mxu0 %v363
    %1025 = vmatpush.msra.mxu0 %v359
    %1026 = vmatpush.msra.mxu0 %v355
    %1027 = vmatmul.f32.gmra.mxu0 %v1009
    %v1028 = vpop.f32.mrf.mxu0
    %v1029 = vadd.f32 0.0, %v1028
    %1030 = vdwg.mxu0
    %1031 = vmatpush.msra.mxu0 %v416
    %1032 = vmatpush.msra.mxu0 %v412
    %1033 = vmatpush.msra.mxu0 %v408
    %1034 = vmatpush.msra.mxu0 %v404
    %1035 = vmatpush.msra.mxu0 %v400
    %1036 = vmatpush.msra.mxu0 %v396
    %1037 = vmatpush.msra.mxu0 %v392
    %1038 = vmatpush.msra.mxu0 %v388
    %1039 = vmatpush.msra.mxu0 %v384
    %1040 = vmatpush.msra.mxu0 %v380
    %1041 = vmatpush.msra.mxu0 %v376
    %1042 = vmatpush.msra.mxu0 %v372
    %1043 = vmatpush.msra.mxu0 %v368
    %1044 = vmatpush.msra.mxu0 %v364
    %1045 = vmatpush.msra.mxu0 %v360
    %1046 = vmatpush.msra.mxu0 %v356
    %1047 = vmatmul.f32.gmra.mxu0 %v1009
    %v1048 = vpop.f32.mrf.mxu0
    %v1049 = vadd.f32 0.0, %v1048
    %1050 = vdwg.mxu0
    %1051 = vmatpush.msra.mxu0 %v417
    %1052 = vmatpush.msra.mxu0 %v413
    %1053 = vmatpush.msra.mxu0 %v409
    %1054 = vmatpush.msra.mxu0 %v405
    %1055 = vmatpush.msra.mxu0 %v401
    %1056 = vmatpush.msra.mxu0 %v397
    %1057 = vmatpush.msra.mxu0 %v393
    %1058 = vmatpush.msra.mxu0 %v389
    %1059 = vmatpush.msra.mxu0 %v385
    %1060 = vmatpush.msra.mxu0 %v381
    %1061 = vmatpush.msra.mxu0 %v377
    %1062 = vmatpush.msra.mxu0 %v373
    %1063 = vmatpush.msra.mxu0 %v369
    %1064 = vmatpush.msra.mxu0 %v365
    %1065 = vmatpush.msra.mxu0 %v361
    %1066 = vmatpush.msra.mxu0 %v357
    %1067 = vmatmul.f32.gmra.mxu0 %v1009
    %v1068 = vpop.f32.mrf.mxu0
    %v1069 = vadd.f32 0.0, %v1068
    %1070 = vdwg.mxu0
    %1071 = vmatpush.msra.mxu0 %v418
    %1072 = vmatpush.msra.mxu0 %v414
    %1073 = vmatpush.msra.mxu0 %v410
    %1074 = vmatpush.msra.mxu0 %v406
    %1075 = vmatpush.msra.mxu0 %v402
    %1076 = vmatpush.msra.mxu0 %v398
    %1077 = vmatpush.msra.mxu0 %v394
    %1078 = vmatpush.msra.mxu0 %v390
    %1079 = vmatpush.msra.mxu0 %v386
    %1080 = vmatpush.msra.mxu0 %v382
    %1081 = vmatpush.msra.mxu0 %v378
    %1082 = vmatpush.msra.mxu0 %v374
    %1083 = vmatpush.msra.mxu0 %v370
    %1084 = vmatpush.msra.mxu0 %v366
    %1085 = vmatpush.msra.mxu0 %v362
    %1086 = vmatpush.msra.mxu0 %v358
    %1087 = vmatmul.f32.gmra.mxu0 %v1009
    %v1088 = vpop.f32.mrf.mxu0
    %v1089 = vadd.f32 0.0, %v1088
    %1090 = vdwg.mxu0
    %v1091 = vadd.f32 %v257, %v1029
    %v1092 = vadd.f32 %v289, %v1049
    %v1093 = vadd.f32 %v321, %v1069
    %v1094 = vadd.f32 %v353, %v1089
    %v1095 = vxor.u32 %v1091, 2147483648
    %v1096 = vxor.u32 %v1092, 2147483648
    %v1097 = vxor.u32 %v1093, 2147483648
    %v1098 = vmul.f32 %v1095, 1.442695
    %v1099 = vpow.pop %v1098
    %v1100 = vmul.f32 %v1096, 1.442695
    %v1101 = vpow.pop %v1100
    %v1102 = vmul.f32 %v1097, 1.442695
    %v1103 = vpow.pop %v1102
    %v1104 = vadd.f32 %v1099, 1.0
    %v1105 = vadd.f32 %v1101, 1.0
    %v1106 = vadd.f32 %v1103, 1.0
    %v1107 = vrcp.pop %v1104
    %v1108 = vmul.f32 %v1104, %v1107
    %v1109 = vsub.f32 1.0, %v1108
    %v1110 = vmul.f32 %v1107, %v1109
    %v1111 = vadd.f32 %v1107, %v1110
    %vm1112 = vweird.f32 %v1104
    %vm1113 = vweird.f32 %v1107
    %vm1114 = vmor %vm1112, %vm1113
    %v1115 = vsel %vm1114, %v1107, %v1111
    %v1116 = vand.u32 2147483647, %v1104
    %vm1117 = vcmp.eq.f32.partialorder %v1116, 8.507059e+37
    %v1118 = vand.u32 %v1104, 2147483648
    %v1119 = vor.u32 1.1754944e-38, %v1118
    %v1120 = vsel %vm1117, %v1119, %v1115
    %v1121 = vmul.f32 1.0, %v1120
    %v1122 = vrcp.pop %v1105
    %v1123 = vmul.f32 %v1105, %v1122
    %v1124 = vsub.f32 1.0, %v1123
    %v1125 = vmul.f32 %v1122, %v1124
    %v1126 = vadd.f32 %v1122, %v1125
    %vm1127 = vweird.f32 %v1105
    %vm1128 = vweird.f32 %v1122
    %vm1129 = vmor %vm1127, %vm1128
    %v1130 = vsel %vm1129, %v1122, %v1126
    %v1131 = vand.u32 2147483647, %v1105
    %vm1132 = vcmp.eq.f32.partialorder %v1131, 8.507059e+37
    %v1133 = vand.u32 %v1105, 2147483648
    %v1134 = vor.u32 1.1754944e-38, %v1133
    %v1135 = vsel %vm1132, %v1134, %v1130
    %v1136 = vmul.f32 1.0, %v1135
    %v1137 = vrcp.pop %v1106
    %v1138 = vmul.f32 %v1106, %v1137
    %v1139 = vsub.f32 1.0, %v1138
    %v1140 = vmul.f32 %v1137, %v1139
    %v1141 = vadd.f32 %v1137, %v1140
    %vm1142 = vweird.f32 %v1106
    %vm1143 = vweird.f32 %v1137
    %vm1144 = vmor %vm1142, %vm1143
    %v1145 = vsel %vm1144, %v1137, %v1141
    %v1146 = vand.u32 2147483647, %v1106
    %vm1147 = vcmp.eq.f32.partialorder %v1146, 8.507059e+37
    %v1148 = vand.u32 %v1106, 2147483648
    %v1149 = vor.u32 1.1754944e-38, %v1148
    %v1150 = vsel %vm1147, %v1149, %v1145
    %v1151 = vmul.f32 1.0, %v1150
    %v1152 = vtanh.pop %v1094
    %v1153 = vmul.f32 %v1136, %v1007
    %v1154 = vmul.f32 %v1121, %v1152
    %v1155 = vadd.f32 %v1153, %v1154
    %v1156 = vtanh.pop %v1155
    %v1157 = vmul.f32 %v1151, %v1156
    %1158 = vst [vmem:[#allocation2 + $0x20] sm:$0xff] %v1157
    %v1159 = vld [vmem:[#allocation2] sm:$0xff]
    %v1160 = vld [vmem:[#allocation2 + $0x8] sm:$0xff]
    %v1161 = vld [vmem:[#allocation2 + $0x10] sm:$0xff]
    %v1162 = vld [vmem:[#allocation2 + $0x18] sm:$0xff]
    %v1163 = vld [vmem:[#allocation2 + $0x20] sm:$0xff]
    %v1164 = vld [vmem:[%s6] sm:$0xff]
    %v1165 = vld [vmem:[%s6 + $0x8] sm:$0xff]
    %v1166 = vld [vmem:[%s6 + $0x10] sm:$0xff]
    %v1167 = vld [vmem:[%s6 + $0x18] sm:$0xff]
    %v1168 = vld [vmem:[%s6 + $0x20] sm:$0xff]
    %v1169 = vld [vmem:[%s6 + $0x28] sm:$0xff]
    %v1170 = vld [vmem:[%s6 + $0x30] sm:$0xff]
    %v1171 = vld [vmem:[%s6 + $0x38] sm:$0xff]
    %v1172 = vld [vmem:[%s6 + $0x40] sm:$0xff]
    %v1173 = vld [vmem:[%s6 + $0x48] sm:$0xff]
    %v1174 = vld [vmem:[%s6 + $0x50] sm:$0xff]
    %v1175 = vld [vmem:[%s6 + $0x58] sm:$0xff]
    %v1176 = vld [vmem:[%s6 + $0x60] sm:$0xff]
    %v1177 = vld [vmem:[%s6 + $0x68] sm:$0xff]
    %v1178 = vld [vmem:[%s6 + $0x70] sm:$0xff]
    %v1179 = vld [vmem:[%s6 + $0x78] sm:$0xff]
    %v1180 = vld [vmem:[%s7] sm:$0x1]
    %v1182 = vperm.slane %v1180, 0
    %1184 = vmatpush.msra.mxu0 %v1179
    %1185 = vmatpush.msra.mxu0 %v1178
    %1186 = vmatpush.msra.mxu0 %v1177
    %1187 = vmatpush.msra.mxu0 %v1176
    %1188 = vmatpush.msra.mxu0 %v1175
    %1189 = vmatpush.msra.mxu0 %v1174
    %1190 = vmatpush.msra.mxu0 %v1173
    %1191 = vmatpush.msra.mxu0 %v1172
    %1192 = vmatpush.msra.mxu0 %v1171
    %1193 = vmatpush.msra.mxu0 %v1170
    %1194 = vmatpush.msra.mxu0 %v1169
    %1195 = vmatpush.msra.mxu0 %v1168
    %1196 = vmatpush.msra.mxu0 %v1167
    %1197 = vmatpush.msra.mxu0 %v1166
    %1198 = vmatpush.msra.mxu0 %v1165
    %1199 = vmatpush.msra.mxu0 %v1164
    %1200 = vmatmul.f32.gmra.mxu0 %v1159
    %v1201 = vpop.f32.mrf.mxu0
    %v1202 = vadd.f32 %v1182, %v1201
    %1203 = vmatmul.f32.gmra.mxu0 %v1160
    %v1204 = vpop.f32.mrf.mxu0
    %v1205 = vadd.f32 %v1182, %v1204
    %1206 = vmatmul.f32.gmra.mxu0 %v1161
    %v1207 = vpop.f32.mrf.mxu0
    %v1208 = vadd.f32 %v1182, %v1207
    %1209 = vmatmul.f32.gmra.mxu0 %v1162
    %v1210 = vpop.f32.mrf.mxu0
    %v1211 = vadd.f32 %v1182, %v1210
    %1212 = vmatmul.f32.gmra.mxu0 %v1163
    %v1213 = vpop.f32.mrf.mxu0
    %v1214 = vadd.f32 %v1182, %v1213
    %1215 = vdwg.mxu0
    %v1221 = vrot.slane %v1202, 1
    %v1222 = vrot.slane %v1202, 2
    %v1223 = vrot.slane %v1202, 3
    %v1224 = vrot.slane %v1202, 4
    %v1225 = vrot.slane %v1202, 5
    %v1226 = vrot.slane %v1202, 6
    %v1227 = vrot.slane %v1202, 7
    %v1228 = vrot.slane %v1205, 1
    %v1229 = vrot.slane %v1205, 2
    %v1230 = vrot.slane %v1205, 3
    %v1231 = vrot.slane %v1205, 4
    %v1232 = vrot.slane %v1205, 5
    %v1233 = vrot.slane %v1205, 6
    %v1234 = vrot.slane %v1205, 7
    %v1235 = vrot.slane %v1208, 1
    %v1236 = vrot.slane %v1208, 2
    %v1237 = vrot.slane %v1208, 3
    %v1238 = vrot.slane %v1208, 4
    %v1239 = vrot.slane %v1208, 5
    %v1240 = vrot.slane %v1208, 6
    %v1241 = vrot.slane %v1208, 7
    %v1242 = vrot.slane %v1211, 1
    %v1243 = vrot.slane %v1211, 2
    %v1244 = vrot.slane %v1211, 3
    %v1245 = vrot.slane %v1211, 4
    %v1246 = vrot.slane %v1211, 5
    %v1247 = vrot.slane %v1211, 6
    %v1248 = vrot.slane %v1211, 7
    %v1249 = vrot.slane %v1214, 1
    %v1250 = vrot.slane %v1214, 2
    %v1251 = vrot.slane %v1214, 3
    %v1252 = vrot.slane %v1214, 4
    %v1253 = vrot.slane %v1214, 5
    %v1254 = vrot.slane %v1214, 6
    %v1255 = vrot.slane %v1214, 7
    %v1256 = vperm.slane %v1202, 0
    %v1257 = vperm.slane %v1221, 0
    %v1258 = vperm.slane %v1222, 0
    %v1259 = vperm.slane %v1223, 0
    %v1260 = vperm.slane %v1224, 0
    %v1261 = vperm.slane %v1225, 0
    %v1262 = vperm.slane %v1226, 0
    %v1263 = vperm.slane %v1227, 0
    %v1264 = vperm.slane %v1205, 0
    %v1265 = vperm.slane %v1228, 0
    %v1266 = vperm.slane %v1229, 0
    %v1267 = vperm.slane %v1230, 0
    %v1268 = vperm.slane %v1231, 0
    %v1269 = vperm.slane %v1232, 0
    %v1270 = vperm.slane %v1233, 0
    %v1271 = vperm.slane %v1234, 0
    %v1272 = vperm.slane %v1208, 0
    %v1273 = vperm.slane %v1235, 0
    %v1274 = vperm.slane %v1236, 0
    %v1275 = vperm.slane %v1237, 0
    %v1276 = vperm.slane %v1238, 0
    %v1277 = vperm.slane %v1239, 0
    %v1278 = vperm.slane %v1240, 0
    %v1279 = vperm.slane %v1241, 0
    %v1280 = vperm.slane %v1211, 0
    %v1281 = vperm.slane %v1242, 0
    %v1282 = vperm.slane %v1243, 0
    %v1283 = vperm.slane %v1244, 0
    %v1284 = vperm.slane %v1245, 0
    %v1285 = vperm.slane %v1246, 0
    %v1286 = vperm.slane %v1247, 0
    %v1287 = vperm.slane %v1248, 0
    %v1288 = vperm.slane %v1214, 0
    %v1289 = vperm.slane %v1249, 0
    %v1290 = vperm.slane %v1250, 0
    %v1291 = vperm.slane %v1251, 0
    %v1292 = vperm.slane %v1252, 0
    %v1293 = vperm.slane %v1253, 0
    %v1294 = vperm.slane %v1254, 0
    %v1295 = vperm.slane %v1255, 0
    %1336 = vrot.lane.b32.xlu0 %v1202, 64
    %v1337 = vpop.permute.xlu0 %1336
    %1338 = vrot.lane.b32.xlu0 %v1205, 64
    %v1339 = vpop.permute.xlu0 %1338
    %1340 = vrot.lane.b32.xlu0 %v1208, 64
    %v1341 = vpop.permute.xlu0 %1340
    %1342 = vrot.lane.b32.xlu0 %v1211, 64
    %v1343 = vpop.permute.xlu0 %1342
    %1344 = vrot.lane.b32.xlu0 %v1214, 64
    %v1345 = vpop.permute.xlu0 %1344
    %v1351 = vadd.f32 %v1256, %v1337
    %v1352 = vadd.f32 %v1257, %v1337
    %v1353 = vadd.f32 %v1258, %v1337
    %v1354 = vadd.f32 %v1259, %v1337
    %v1355 = vadd.f32 %v1260, %v1337
    %v1356 = vadd.f32 %v1261, %v1337
    %v1357 = vadd.f32 %v1262, %v1337
    %v1358 = vadd.f32 %v1263, %v1337
    %v1359 = vadd.f32 %v1264, %v1339
    %v1360 = vadd.f32 %v1265, %v1339
    %v1361 = vadd.f32 %v1266, %v1339
    %v1362 = vadd.f32 %v1267, %v1339
    %v1363 = vadd.f32 %v1268, %v1339
    %v1364 = vadd.f32 %v1269, %v1339
    %v1365 = vadd.f32 %v1270, %v1339
    %v1366 = vadd.f32 %v1271, %v1339
    %v1367 = vadd.f32 %v1272, %v1341
    %v1368 = vadd.f32 %v1273, %v1341
    %v1369 = vadd.f32 %v1274, %v1341
    %v1370 = vadd.f32 %v1275, %v1341
    %v1371 = vadd.f32 %v1276, %v1341
    %v1372 = vadd.f32 %v1277, %v1341
    %v1373 = vadd.f32 %v1278, %v1341
    %v1374 = vadd.f32 %v1279, %v1341
    %v1375 = vadd.f32 %v1280, %v1343
    %v1376 = vadd.f32 %v1281, %v1343
    %v1377 = vadd.f32 %v1282, %v1343
    %v1378 = vadd.f32 %v1283, %v1343
    %v1379 = vadd.f32 %v1284, %v1343
    %v1380 = vadd.f32 %v1285, %v1343
    %v1381 = vadd.f32 %v1286, %v1343
    %v1382 = vadd.f32 %v1287, %v1343
    %v1383 = vadd.f32 %v1288, %v1345
    %v1384 = vadd.f32 %v1289, %v1345
    %v1385 = vadd.f32 %v1290, %v1345
    %v1386 = vadd.f32 %v1291, %v1345
    %v1387 = vadd.f32 %v1292, %v1345
    %v1388 = vadd.f32 %v1293, %v1345
    %v1389 = vadd.f32 %v1294, %v1345
    %v1390 = vadd.f32 %v1295, %v1345
    %v1391 = vtanh.pop %v1351
    %v1392 = vtanh.pop %v1352
    %v1393 = vtanh.pop %v1353
    %v1394 = vtanh.pop %v1354
    %v1395 = vtanh.pop %v1355
    %v1396 = vtanh.pop %v1356
    %v1397 = vtanh.pop %v1357
    %v1398 = vtanh.pop %v1358
    %v1399 = vtanh.pop %v1359
    %v1400 = vtanh.pop %v1360
    %v1401 = vtanh.pop %v1361
    %v1402 = vtanh.pop %v1362
    %v1403 = vtanh.pop %v1363
    %v1404 = vtanh.pop %v1364
    %v1405 = vtanh.pop %v1365
    %v1406 = vtanh.pop %v1366
    %v1407 = vtanh.pop %v1367
    %v1408 = vtanh.pop %v1368
    %v1409 = vtanh.pop %v1369
    %v1410 = vtanh.pop %v1370
    %v1411 = vtanh.pop %v1371
    %v1412 = vtanh.pop %v1372
    %v1413 = vtanh.pop %v1373
    %v1414 = vtanh.pop %v1374
    %v1415 = vtanh.pop %v1375
    %v1416 = vtanh.pop %v1376
    %v1417 = vtanh.pop %v1377
    %v1418 = vtanh.pop %v1378
    %v1419 = vtanh.pop %v1379
    %v1420 = vtanh.pop %v1380
    %v1421 = vtanh.pop %v1381
    %v1422 = vtanh.pop %v1382
    %v1423 = vtanh.pop %v1383
    %v1424 = vtanh.pop %v1384
    %v1425 = vtanh.pop %v1385
    %v1426 = vtanh.pop %v1386
    %v1427 = vtanh.pop %v1387
    %v1428 = vtanh.pop %v1388
    %v1429 = vtanh.pop %v1389
    %v1430 = vtanh.pop %v1390
    %v1431 = vld [vmem:[%s8] sm:$0x1]
    %v1433 = vperm.slane %v1431, 0
    %1434 = vrot.lane.b32.xlu0 %v1433, 64
    %v1435 = vpop.permute.xlu0 %1434
    %v1437 = vmul.f32 %v1391, %v1435
    %v1438 = vmul.f32 %v1392, %v1435
    %v1439 = vmul.f32 %v1393, %v1435
    %v1440 = vmul.f32 %v1394, %v1435
    %v1441 = vmul.f32 %v1395, %v1435
    %v1442 = vmul.f32 %v1396, %v1435
    %v1443 = vmul.f32 %v1397, %v1435
    %v1444 = vmul.f32 %v1398, %v1435
    %v1445 = vmul.f32 %v1399, %v1435
    %v1446 = vmul.f32 %v1400, %v1435
    %v1447 = vmul.f32 %v1401, %v1435
    %v1448 = vmul.f32 %v1402, %v1435
    %v1449 = vmul.f32 %v1403, %v1435
    %v1450 = vmul.f32 %v1404, %v1435
    %v1451 = vmul.f32 %v1405, %v1435
    %v1452 = vmul.f32 %v1406, %v1435
    %v1453 = vmul.f32 %v1407, %v1435
    %v1454 = vmul.f32 %v1408, %v1435
    %v1455 = vmul.f32 %v1409, %v1435
    %v1456 = vmul.f32 %v1410, %v1435
    %v1457 = vmul.f32 %v1411, %v1435
    %v1458 = vmul.f32 %v1412, %v1435
    %v1459 = vmul.f32 %v1413, %v1435
    %v1460 = vmul.f32 %v1414, %v1435
    %v1461 = vmul.f32 %v1415, %v1435
    %v1462 = vmul.f32 %v1416, %v1435
    %v1463 = vmul.f32 %v1417, %v1435
    %v1464 = vmul.f32 %v1418, %v1435
    %v1465 = vmul.f32 %v1419, %v1435
    %v1466 = vmul.f32 %v1420, %v1435
    %v1467 = vmul.f32 %v1421, %v1435
    %v1468 = vmul.f32 %v1422, %v1435
    %v1469 = vmul.f32 %v1423, %v1435
    %v1470 = vmul.f32 %v1424, %v1435
    %v1471 = vmul.f32 %v1425, %v1435
    %v1472 = vmul.f32 %v1426, %v1435
    %v1473 = vmul.f32 %v1427, %v1435
    %v1474 = vmul.f32 %v1428, %v1435
    %v1475 = vmul.f32 %v1429, %v1435
    %v1476 = vmul.f32 %v1430, %v1435
    %1517 = vrot.lane.b32.xlu0 %v1437, 64
    %v1518 = vpop.permute.xlu0 %1517
    %1519 = vrot.lane.b32.xlu0 %v1438, 64
    %v1520 = vpop.permute.xlu0 %1519
    %1521 = vrot.lane.b32.xlu0 %v1439, 64
    %v1522 = vpop.permute.xlu0 %1521
    %1523 = vrot.lane.b32.xlu0 %v1440, 64
    %v1524 = vpop.permute.xlu0 %1523
    %1525 = vrot.lane.b32.xlu0 %v1441, 64
    %v1526 = vpop.permute.xlu0 %1525
    %1527 = vrot.lane.b32.xlu0 %v1442, 64
    %v1528 = vpop.permute.xlu0 %1527
    %1529 = vrot.lane.b32.xlu0 %v1443, 64
    %v1530 = vpop.permute.xlu0 %1529
    %1531 = vrot.lane.b32.xlu0 %v1444, 64
    %v1532 = vpop.permute.xlu0 %1531
    %1533 = vrot.lane.b32.xlu0 %v1445, 64
    %v1534 = vpop.permute.xlu0 %1533
    %1535 = vrot.lane.b32.xlu0 %v1446, 64
    %v1536 = vpop.permute.xlu0 %1535
    %1537 = vrot.lane.b32.xlu0 %v1447, 64
    %v1538 = vpop.permute.xlu0 %1537
    %1539 = vrot.lane.b32.xlu0 %v1448, 64
    %v1540 = vpop.permute.xlu0 %1539
    %1541 = vrot.lane.b32.xlu0 %v1449, 64
    %v1542 = vpop.permute.xlu0 %1541
    %1543 = vrot.lane.b32.xlu0 %v1450, 64
    %v1544 = vpop.permute.xlu0 %1543
    %1545 = vrot.lane.b32.xlu0 %v1451, 64
    %v1546 = vpop.permute.xlu0 %1545
    %1547 = vrot.lane.b32.xlu0 %v1452, 64
    %v1548 = vpop.permute.xlu0 %1547
    %1549 = vrot.lane.b32.xlu0 %v1453, 64
    %v1550 = vpop.permute.xlu0 %1549
    %1551 = vrot.lane.b32.xlu0 %v1454, 64
    %v1552 = vpop.permute.xlu0 %1551
    %1553 = vrot.lane.b32.xlu0 %v1455, 64
    %v1554 = vpop.permute.xlu0 %1553
    %1555 = vrot.lane.b32.xlu0 %v1456, 64
    %v1556 = vpop.permute.xlu0 %1555
    %1557 = vrot.lane.b32.xlu0 %v1457, 64
    %v1558 = vpop.permute.xlu0 %1557
    %1559 = vrot.lane.b32.xlu0 %v1458, 64
    %v1560 = vpop.permute.xlu0 %1559
    %1561 = vrot.lane.b32.xlu0 %v1459, 64
    %v1562 = vpop.permute.xlu0 %1561
    %1563 = vrot.lane.b32.xlu0 %v1460, 64
    %v1564 = vpop.permute.xlu0 %1563
    %1565 = vrot.lane.b32.xlu0 %v1461, 64
    %v1566 = vpop.permute.xlu0 %1565
    %1567 = vrot.lane.b32.xlu0 %v1462, 64
    %v1568 = vpop.permute.xlu0 %1567
    %1569 = vrot.lane.b32.xlu0 %v1463, 64
    %v1570 = vpop.permute.xlu0 %1569
    %1571 = vrot.lane.b32.xlu0 %v1464, 64
    %v1572 = vpop.permute.xlu0 %1571
    %1573 = vrot.lane.b32.xlu0 %v1465, 64
    %v1574 = vpop.permute.xlu0 %1573
    %1575 = vrot.lane.b32.xlu0 %v1466, 64
    %v1576 = vpop.permute.xlu0 %1575
    %1577 = vrot.lane.b32.xlu0 %v1467, 64
    %v1578 = vpop.permute.xlu0 %1577
    %1579 = vrot.lane.b32.xlu0 %v1468, 64
    %v1580 = vpop.permute.xlu0 %1579
    %1581 = vrot.lane.b32.xlu0 %v1469, 64
    %v1582 = vpop.permute.xlu0 %1581
    %1583 = vrot.lane.b32.xlu0 %v1470, 64
    %v1584 = vpop.permute.xlu0 %1583
    %1585 = vrot.lane.b32.xlu0 %v1471, 64
    %v1586 = vpop.permute.xlu0 %1585
    %1587 = vrot.lane.b32.xlu0 %v1472, 64
    %v1588 = vpop.permute.xlu0 %1587
    %1589 = vrot.lane.b32.xlu0 %v1473, 64
    %v1590 = vpop.permute.xlu0 %1589
    %1591 = vrot.lane.b32.xlu0 %v1474, 64
    %v1592 = vpop.permute.xlu0 %1591
    %1593 = vrot.lane.b32.xlu0 %v1475, 64
    %v1594 = vpop.permute.xlu0 %1593
    %1595 = vrot.lane.b32.xlu0 %v1476, 64
    %v1596 = vpop.permute.xlu0 %1595
    %v1637 = vsel %vm211, %v1518, 0.0
    %1638 = vadd.xlane.f32.xlu0 %v1637
    %v1639 = vpop.xlane.xlu0 %1638
    %v1640 = vsel %vm211, %v1520, 0.0
    %1641 = vadd.xlane.f32.xlu0 %v1640
    %v1642 = vpop.xlane.xlu0 %1641
    %v1643 = vsel %vm211, %v1522, 0.0
    %1644 = vadd.xlane.f32.xlu0 %v1643
    %v1645 = vpop.xlane.xlu0 %1644
    %v1646 = vsel %vm211, %v1524, 0.0
    %1647 = vadd.xlane.f32.xlu0 %v1646
    %v1648 = vpop.xlane.xlu0 %1647
    %v1649 = vsel %vm211, %v1526, 0.0
    %1650 = vadd.xlane.f32.xlu0 %v1649
    %v1651 = vpop.xlane.xlu0 %1650
    %v1652 = vsel %vm211, %v1528, 0.0
    %1653 = vadd.xlane.f32.xlu0 %v1652
    %v1654 = vpop.xlane.xlu0 %1653
    %v1655 = vsel %vm211, %v1530, 0.0
    %1656 = vadd.xlane.f32.xlu0 %v1655
    %v1657 = vpop.xlane.xlu0 %1656
    %v1658 = vsel %vm211, %v1532, 0.0
    %1659 = vadd.xlane.f32.xlu0 %v1658
    %v1660 = vpop.xlane.xlu0 %1659
    %v1661 = vsel %vm211, %v1534, 0.0
    %1662 = vadd.xlane.f32.xlu0 %v1661
    %v1663 = vpop.xlane.xlu0 %1662
    %v1664 = vsel %vm211, %v1536, 0.0
    %1665 = vadd.xlane.f32.xlu0 %v1664
    %v1666 = vpop.xlane.xlu0 %1665
    %v1667 = vsel %vm211, %v1538, 0.0
    %1668 = vadd.xlane.f32.xlu0 %v1667
    %v1669 = vpop.xlane.xlu0 %1668
    %v1670 = vsel %vm211, %v1540, 0.0
    %1671 = vadd.xlane.f32.xlu0 %v1670
    %v1672 = vpop.xlane.xlu0 %1671
    %v1673 = vsel %vm211, %v1542, 0.0
    %1674 = vadd.xlane.f32.xlu0 %v1673
    %v1675 = vpop.xlane.xlu0 %1674
    %v1676 = vsel %vm211, %v1544, 0.0
    %1677 = vadd.xlane.f32.xlu0 %v1676
    %v1678 = vpop.xlane.xlu0 %1677
    %v1679 = vsel %vm211, %v1546, 0.0
    %1680 = vadd.xlane.f32.xlu0 %v1679
    %v1681 = vpop.xlane.xlu0 %1680
    %v1682 = vsel %vm211, %v1548, 0.0
    %1683 = vadd.xlane.f32.xlu0 %v1682
    %v1684 = vpop.xlane.xlu0 %1683
    %v1685 = vsel %vm211, %v1550, 0.0
    %1686 = vadd.xlane.f32.xlu0 %v1685
    %v1687 = vpop.xlane.xlu0 %1686
    %v1688 = vsel %vm211, %v1552, 0.0
    %1689 = vadd.xlane.f32.xlu0 %v1688
    %v1690 = vpop.xlane.xlu0 %1689
    %v1691 = vsel %vm211, %v1554, 0.0
    %1692 = vadd.xlane.f32.xlu0 %v1691
    %v1693 = vpop.xlane.xlu0 %1692
    %v1694 = vsel %vm211, %v1556, 0.0
    %1695 = vadd.xlane.f32.xlu0 %v1694
    %v1696 = vpop.xlane.xlu0 %1695
    %v1697 = vsel %vm211, %v1558, 0.0
    %1698 = vadd.xlane.f32.xlu0 %v1697
    %v1699 = vpop.xlane.xlu0 %1698
    %v1700 = vsel %vm211, %v1560, 0.0
    %1701 = vadd.xlane.f32.xlu0 %v1700
    %v1702 = vpop.xlane.xlu0 %1701
    %v1703 = vsel %vm211, %v1562, 0.0
    %1704 = vadd.xlane.f32.xlu0 %v1703
    %v1705 = vpop.xlane.xlu0 %1704
    %v1706 = vsel %vm211, %v1564, 0.0
    %1707 = vadd.xlane.f32.xlu0 %v1706
    %v1708 = vpop.xlane.xlu0 %1707
    %v1709 = vsel %vm211, %v1566, 0.0
    %1710 = vadd.xlane.f32.xlu0 %v1709
    %v1711 = vpop.xlane.xlu0 %1710
    %v1712 = vsel %vm211, %v1568, 0.0
    %1713 = vadd.xlane.f32.xlu0 %v1712
    %v1714 = vpop.xlane.xlu0 %1713
    %v1715 = vsel %vm211, %v1570, 0.0
    %1716 = vadd.xlane.f32.xlu0 %v1715
    %v1717 = vpop.xlane.xlu0 %1716
    %v1718 = vsel %vm211, %v1572, 0.0
    %1719 = vadd.xlane.f32.xlu0 %v1718
    %v1720 = vpop.xlane.xlu0 %1719
    %v1721 = vsel %vm211, %v1574, 0.0
    %1722 = vadd.xlane.f32.xlu0 %v1721
    %v1723 = vpop.xlane.xlu0 %1722
    %v1724 = vsel %vm211, %v1576, 0.0
    %1725 = vadd.xlane.f32.xlu0 %v1724
    %v1726 = vpop.xlane.xlu0 %1725
    %v1727 = vsel %vm211, %v1578, 0.0
    %1728 = vadd.xlane.f32.xlu0 %v1727
    %v1729 = vpop.xlane.xlu0 %1728
    %v1730 = vsel %vm211, %v1580, 0.0
    %1731 = vadd.xlane.f32.xlu0 %v1730
    %v1732 = vpop.xlane.xlu0 %1731
    %v1733 = vsel %vm211, %v1582, 0.0
    %1734 = vadd.xlane.f32.xlu0 %v1733
    %v1735 = vpop.xlane.xlu0 %1734
    %v1736 = vsel %vm211, %v1584, 0.0
    %1737 = vadd.xlane.f32.xlu0 %v1736
    %v1738 = vpop.xlane.xlu0 %1737
    %v1739 = vsel %vm211, %v1586, 0.0
    %1740 = vadd.xlane.f32.xlu0 %v1739
    %v1741 = vpop.xlane.xlu0 %1740
    %v1742 = vsel %vm211, %v1588, 0.0
    %1743 = vadd.xlane.f32.xlu0 %v1742
    %v1744 = vpop.xlane.xlu0 %1743
    %v1745 = vsel %vm211, %v1590, 0.0
    %1746 = vadd.xlane.f32.xlu0 %v1745
    %v1747 = vpop.xlane.xlu0 %1746
    %v1748 = vsel %vm211, %v1592, 0.0
    %1749 = vadd.xlane.f32.xlu0 %v1748
    %v1750 = vpop.xlane.xlu0 %1749
    %v1751 = vsel %vm211, %v1594, 0.0
    %1752 = vadd.xlane.f32.xlu0 %v1751
    %v1753 = vpop.xlane.xlu0 %1752
    %v1754 = vsel %vm211, %v1596, 0.0
    %1755 = vadd.xlane.f32.xlu0 %v1754
    %v1756 = vpop.xlane.xlu0 %1755
    %v1757 = vld [vmem:[#allocation3] sm:$0x1]
    %v1759 = vperm.slane %v1757, 0
    %1760 = vset.pattern.permute.xlu0 0
    %1761 = vperm.xlu0 %1760, %v1759
    %v1762 = vpop.permute.xlu0 %1761
    %v1764 = vadd.f32 %v1639, %v1762
    %v1765 = vadd.f32 %v1642, %v1762
    %v1766 = vadd.f32 %v1645, %v1762
    %v1767 = vadd.f32 %v1648, %v1762
    %v1768 = vadd.f32 %v1651, %v1762
    %v1769 = vadd.f32 %v1654, %v1762
    %v1770 = vadd.f32 %v1657, %v1762
    %v1771 = vadd.f32 %v1660, %v1762
    %v1772 = vadd.f32 %v1663, %v1762
    %v1773 = vadd.f32 %v1666, %v1762
    %v1774 = vadd.f32 %v1669, %v1762
    %v1775 = vadd.f32 %v1672, %v1762
    %v1776 = vadd.f32 %v1675, %v1762
    %v1777 = vadd.f32 %v1678, %v1762
    %v1778 = vadd.f32 %v1681, %v1762
    %v1779 = vadd.f32 %v1684, %v1762
    %v1780 = vadd.f32 %v1687, %v1762
    %v1781 = vadd.f32 %v1690, %v1762
    %v1782 = vadd.f32 %v1693, %v1762
    %v1783 = vadd.f32 %v1696, %v1762
    %v1784 = vadd.f32 %v1699, %v1762
    %v1785 = vadd.f32 %v1702, %v1762
    %v1786 = vadd.f32 %v1705, %v1762
    %v1787 = vadd.f32 %v1708, %v1762
    %v1788 = vadd.f32 %v1711, %v1762
    %v1789 = vadd.f32 %v1714, %v1762
    %v1790 = vadd.f32 %v1717, %v1762
    %v1791 = vadd.f32 %v1720, %v1762
    %v1792 = vadd.f32 %v1723, %v1762
    %v1793 = vadd.f32 %v1726, %v1762
    %v1794 = vadd.f32 %v1729, %v1762
    %v1795 = vadd.f32 %v1732, %v1762
    %v1796 = vadd.f32 %v1735, %v1762
    %v1797 = vadd.f32 %v1738, %v1762
    %v1798 = vadd.f32 %v1741, %v1762
    %v1799 = vadd.f32 %v1744, %v1762
    %v1800 = vadd.f32 %v1747, %v1762
    %v1801 = vadd.f32 %v1750, %v1762
    %v1802 = vadd.f32 %v1753, %v1762
    %v1803 = vadd.f32 %v1756, %v1762
    %v1844 = vlaneseq
    %v1845 = vand.u32 %v1844, 127
    %v1846 = vperm.slane %v1764, %v1845
    %v1847 = vperm.slane %v1765, %v1845
    %v1848 = vperm.slane %v1766, %v1845
    %v1849 = vperm.slane %v1767, %v1845
    %v1850 = vperm.slane %v1768, %v1845
    %v1851 = vperm.slane %v1769, %v1845
    %v1852 = vperm.slane %v1770, %v1845
    %v1853 = vperm.slane %v1771, %v1845
    %v1854 = vperm.slane %v1772, %v1845
    %v1855 = vperm.slane %v1773, %v1845
    %v1856 = vperm.slane %v1774, %v1845
    %v1857 = vperm.slane %v1775, %v1845
    %v1858 = vperm.slane %v1776, %v1845
    %v1859 = vperm.slane %v1777, %v1845
    %v1860 = vperm.slane %v1778, %v1845
    %v1861 = vperm.slane %v1779, %v1845
    %v1862 = vperm.slane %v1780, %v1845
    %v1863 = vperm.slane %v1781, %v1845
    %v1864 = vperm.slane %v1782, %v1845
    %v1865 = vperm.slane %v1783, %v1845
    %v1866 = vperm.slane %v1784, %v1845
    %v1867 = vperm.slane %v1785, %v1845
    %v1868 = vperm.slane %v1786, %v1845
    %v1869 = vperm.slane %v1787, %v1845
    %v1870 = vperm.slane %v1788, %v1845
    %v1871 = vperm.slane %v1789, %v1845
    %v1872 = vperm.slane %v1790, %v1845
    %v1873 = vperm.slane %v1791, %v1845
    %v1874 = vperm.slane %v1792, %v1845
    %v1875 = vperm.slane %v1793, %v1845
    %v1876 = vperm.slane %v1794, %v1845
    %v1877 = vperm.slane %v1795, %v1845
    %v1878 = vperm.slane %v1796, %v1845
    %v1879 = vperm.slane %v1797, %v1845
    %v1880 = vperm.slane %v1798, %v1845
    %v1881 = vperm.slane %v1799, %v1845
    %v1882 = vperm.slane %v1800, %v1845
    %v1883 = vperm.slane %v1801, %v1845
    %v1884 = vperm.slane %v1802, %v1845
    %v1885 = vperm.slane %v1803, %v1845
    %vm1886 = vcmask 1041409
    %v1887 = vsel %vm1886, %v1847, %v1846
    %vm1888 = vcmask 1042434
    %v1889 = vsel %vm1888, %v1848, %v1887
    %vm1890 = vcmask 1043459
    %v1891 = vsel %vm1890, %v1849, %v1889
    %vm1892 = vcmask 1044484
    %v1893 = vsel %vm1892, %v1850, %v1891
    %vm1894 = vcmask 1045509
    %v1895 = vsel %vm1894, %v1851, %v1893
    %vm1896 = vcmask 1046534
    %v1897 = vsel %vm1896, %v1852, %v1895
    %vm1898 = vcmask 1047559
    %v1899 = vsel %vm1898, %v1853, %v1897
    %v1900 = vsel %vm1886, %v1855, %v1854
    %v1901 = vsel %vm1888, %v1856, %v1900
    %v1902 = vsel %vm1890, %v1857, %v1901
    %v1903 = vsel %vm1892, %v1858, %v1902
    %v1904 = vsel %vm1894, %v1859, %v1903
    %v1905 = vsel %vm1896, %v1860, %v1904
    %v1906 = vsel %vm1898, %v1861, %v1905
    %v1907 = vsel %vm1886, %v1863, %v1862
    %v1908 = vsel %vm1888, %v1864, %v1907
    %v1909 = vsel %vm1890, %v1865, %v1908
    %v1910 = vsel %vm1892, %v1866, %v1909
    %v1911 = vsel %vm1894, %v1867, %v1910
    %v1912 = vsel %vm1896, %v1868, %v1911
    %v1913 = vsel %vm1898, %v1869, %v1912
    %v1914 = vsel %vm1886, %v1871, %v1870
    %v1915 = vsel %vm1888, %v1872, %v1914
    %v1916 = vsel %vm1890, %v1873, %v1915
    %v1917 = vsel %vm1892, %v1874, %v1916
    %v1918 = vsel %vm1894, %v1875, %v1917
    %v1919 = vsel %vm1896, %v1876, %v1918
    %v1920 = vsel %vm1898, %v1877, %v1919
    %v1921 = vsel %vm1886, %v1879, %v1878
    %v1922 = vsel %vm1888, %v1880, %v1921
    %v1923 = vsel %vm1890, %v1881, %v1922
    %v1924 = vsel %vm1892, %v1882, %v1923
    %v1925 = vsel %vm1894, %v1883, %v1924
    %v1926 = vsel %vm1896, %v1884, %v1925
    %v1927 = vsel %vm1898, %v1885, %v1926
    %v1933 = vsel %vm76, %v1899, -inf
    %1934 = vmax.xlane.f32.xlu0 %v1933
    %v1935 = vpop.xlane.xlu0 %1934
    %v1936 = vsel %vm76, %v1906, -inf
    %1937 = vmax.xlane.f32.xlu0 %v1936
    %v1938 = vpop.xlane.xlu0 %1937
    %v1939 = vsel %vm76, %v1913, -inf
    %1940 = vmax.xlane.f32.xlu0 %v1939
    %v1941 = vpop.xlane.xlu0 %1940
    %v1942 = vsel %vm76, %v1920, -inf
    %1943 = vmax.xlane.f32.xlu0 %v1942
    %v1944 = vpop.xlane.xlu0 %1943
    %v1945 = vsel %vm76, %v1927, -inf
    %1946 = vmax.xlane.f32.xlu0 %v1945
    %v1947 = vpop.xlane.xlu0 %1946
    %v1953 = vperm.slane %v1935, 0
    %v1954 = vperm.slane %v1935, 1
    %v1955 = vperm.slane %v1935, 2
    %v1956 = vperm.slane %v1935, 3
    %v1957 = vperm.slane %v1935, 4
    %v1958 = vperm.slane %v1935, 5
    %v1959 = vperm.slane %v1935, 6
    %v1960 = vperm.slane %v1935, 7
    %v1961 = vperm.slane %v1938, 0
    %v1962 = vperm.slane %v1938, 1
    %v1963 = vperm.slane %v1938, 2
    %v1964 = vperm.slane %v1938, 3
    %v1965 = vperm.slane %v1938, 4
    %v1966 = vperm.slane %v1938, 5
    %v1967 = vperm.slane %v1938, 6
    %v1968 = vperm.slane %v1938, 7
    %v1969 = vperm.slane %v1941, 0
    %v1970 = vperm.slane %v1941, 1
    %v1971 = vperm.slane %v1941, 2
    %v1972 = vperm.slane %v1941, 3
    %v1973 = vperm.slane %v1941, 4
    %v1974 = vperm.slane %v1941, 5
    %v1975 = vperm.slane %v1941, 6
    %v1976 = vperm.slane %v1941, 7
    %v1977 = vperm.slane %v1944, 0
    %v1978 = vperm.slane %v1944, 1
    %v1979 = vperm.slane %v1944, 2
    %v1980 = vperm.slane %v1944, 3
    %v1981 = vperm.slane %v1944, 4
    %v1982 = vperm.slane %v1944, 5
    %v1983 = vperm.slane %v1944, 6
    %v1984 = vperm.slane %v1944, 7
    %v1985 = vperm.slane %v1947, 0
    %v1986 = vperm.slane %v1947, 1
    %v1987 = vperm.slane %v1947, 2
    %v1988 = vperm.slane %v1947, 3
    %v1989 = vperm.slane %v1947, 4
    %v1990 = vperm.slane %v1947, 5
    %v1991 = vperm.slane %v1947, 6
    %v1992 = vperm.slane %v1947, 7
    %v2033 = vsub.f32 %v1764, %v1953
    %v2034 = vsub.f32 %v1765, %v1954
    %v2035 = vsub.f32 %v1766, %v1955
    %v2036 = vsub.f32 %v1767, %v1956
    %v2037 = vsub.f32 %v1768, %v1957
    %v2038 = vsub.f32 %v1769, %v1958
    %v2039 = vsub.f32 %v1770, %v1959
    %v2040 = vsub.f32 %v1771, %v1960
    %v2041 = vsub.f32 %v1772, %v1961
    %v2042 = vsub.f32 %v1773, %v1962
    %v2043 = vsub.f32 %v1774, %v1963
    %v2044 = vsub.f32 %v1775, %v1964
    %v2045 = vsub.f32 %v1776, %v1965
    %v2046 = vsub.f32 %v1777, %v1966
    %v2047 = vsub.f32 %v1778, %v1967
    %v2048 = vsub.f32 %v1779, %v1968
    %v2049 = vsub.f32 %v1780, %v1969
    %v2050 = vsub.f32 %v1781, %v1970
    %v2051 = vsub.f32 %v1782, %v1971
    %v2052 = vsub.f32 %v1783, %v1972
    %v2053 = vsub.f32 %v1784, %v1973
    %v2054 = vsub.f32 %v1785, %v1974
    %v2055 = vsub.f32 %v1786, %v1975
    %v2056 = vsub.f32 %v1787, %v1976
    %v2057 = vsub.f32 %v1788, %v1977
    %v2058 = vsub.f32 %v1789, %v1978
    %v2059 = vsub.f32 %v1790, %v1979
    %v2060 = vsub.f32 %v1791, %v1980
    %v2061 = vsub.f32 %v1792, %v1981
    %v2062 = vsub.f32 %v1793, %v1982
    %v2063 = vsub.f32 %v1794, %v1983
    %v2064 = vsub.f32 %v1795, %v1984
    %v2065 = vsub.f32 %v1796, %v1985
    %v2066 = vsub.f32 %v1797, %v1986
    %v2067 = vsub.f32 %v1798, %v1987
    %v2068 = vsub.f32 %v1799, %v1988
    %v2069 = vsub.f32 %v1800, %v1989
    %v2070 = vsub.f32 %v1801, %v1990
    %v2071 = vsub.f32 %v1802, %v1991
    %v2072 = vsub.f32 %v1803, %v1992
    %v2073 = vmul.f32 %v2033, 1.442695
    %v2074 = vpow.pop %v2073
    %v2075 = vmul.f32 %v2034, 1.442695
    %v2076 = vpow.pop %v2075
    %v2077 = vmul.f32 %v2035, 1.442695
    %v2078 = vpow.pop %v2077
    %v2079 = vmul.f32 %v2036, 1.442695
    %v2080 = vpow.pop %v2079
    %v2081 = vmul.f32 %v2037, 1.442695
    %v2082 = vpow.pop %v2081
    %v2083 = vmul.f32 %v2038, 1.442695
    %v2084 = vpow.pop %v2083
    %v2085 = vmul.f32 %v2039, 1.442695
    %v2086 = vpow.pop %v2085
    %v2087 = vmul.f32 %v2040, 1.442695
    %v2088 = vpow.pop %v2087
    %v2089 = vmul.f32 %v2041, 1.442695
    %v2090 = vpow.pop %v2089
    %v2091 = vmul.f32 %v2042, 1.442695
    %v2092 = vpow.pop %v2091
    %v2093 = vmul.f32 %v2043, 1.442695
    %v2094 = vpow.pop %v2093
    %v2095 = vmul.f32 %v2044, 1.442695
    %v2096 = vpow.pop %v2095
    %v2097 = vmul.f32 %v2045, 1.442695
    %v2098 = vpow.pop %v2097
    %v2099 = vmul.f32 %v2046, 1.442695
    %v2100 = vpow.pop %v2099
    %v2101 = vmul.f32 %v2047, 1.442695
    %v2102 = vpow.pop %v2101
    %v2103 = vmul.f32 %v2048, 1.442695
    %v2104 = vpow.pop %v2103
    %v2105 = vmul.f32 %v2049, 1.442695
    %v2106 = vpow.pop %v2105
    %v2107 = vmul.f32 %v2050, 1.442695
    %v2108 = vpow.pop %v2107
    %v2109 = vmul.f32 %v2051, 1.442695
    %v2110 = vpow.pop %v2109
    %v2111 = vmul.f32 %v2052, 1.442695
    %v2112 = vpow.pop %v2111
    %v2113 = vmul.f32 %v2053, 1.442695
    %v2114 = vpow.pop %v2113
    %v2115 = vmul.f32 %v2054, 1.442695
    %v2116 = vpow.pop %v2115
    %v2117 = vmul.f32 %v2055, 1.442695
    %v2118 = vpow.pop %v2117
    %v2119 = vmul.f32 %v2056, 1.442695
    %v2120 = vpow.pop %v2119
    %v2121 = vmul.f32 %v2057, 1.442695
    %v2122 = vpow.pop %v2121
    %v2123 = vmul.f32 %v2058, 1.442695
    %v2124 = vpow.pop %v2123
    %v2125 = vmul.f32 %v2059, 1.442695
    %v2126 = vpow.pop %v2125
    %v2127 = vmul.f32 %v2060, 1.442695
    %v2128 = vpow.pop %v2127
    %v2129 = vmul.f32 %v2061, 1.442695
    %v2130 = vpow.pop %v2129
    %v2131 = vmul.f32 %v2062, 1.442695
    %v2132 = vpow.pop %v2131
    %v2133 = vmul.f32 %v2063, 1.442695
    %v2134 = vpow.pop %v2133
    %v2135 = vmul.f32 %v2064, 1.442695
    %v2136 = vpow.pop %v2135
    %v2137 = vmul.f32 %v2065, 1.442695
    %v2138 = vpow.pop %v2137
    %v2139 = vmul.f32 %v2066, 1.442695
    %v2140 = vpow.pop %v2139
    %v2141 = vmul.f32 %v2067, 1.442695
    %v2142 = vpow.pop %v2141
    %v2143 = vmul.f32 %v2068, 1.442695
    %v2144 = vpow.pop %v2143
    %v2145 = vmul.f32 %v2069, 1.442695
    %v2146 = vpow.pop %v2145
    %v2147 = vmul.f32 %v2070, 1.442695
    %v2148 = vpow.pop %v2147
    %v2149 = vmul.f32 %v2071, 1.442695
    %v2150 = vpow.pop %v2149
    %v2151 = vmul.f32 %v2072, 1.442695
    %v2152 = vpow.pop %v2151
    %2193 = vset.pattern.permute.xlu0 0
    %2194 = vperm.xlu0 %2193, %v2074
    %v2195 = vpop.permute.xlu0 %2194
    %2196 = vset.pattern.permute.xlu0 0
    %2197 = vperm.xlu0 %2196, %v2076
    %v2198 = vpop.permute.xlu0 %2197
    %2199 = vset.pattern.permute.xlu0 0
    %2200 = vperm.xlu0 %2199, %v2078
    %v2201 = vpop.permute.xlu0 %2200
    %2202 = vset.pattern.permute.xlu0 0
    %2203 = vperm.xlu0 %2202, %v2080
    %v2204 = vpop.permute.xlu0 %2203
    %2205 = vset.pattern.permute.xlu0 0
    %2206 = vperm.xlu0 %2205, %v2082
    %v2207 = vpop.permute.xlu0 %2206
    %2208 = vset.pattern.permute.xlu0 0
    %2209 = vperm.xlu0 %2208, %v2084
    %v2210 = vpop.permute.xlu0 %2209
    %2211 = vset.pattern.permute.xlu0 0
    %2212 = vperm.xlu0 %2211, %v2086
    %v2213 = vpop.permute.xlu0 %2212
    %2214 = vset.pattern.permute.xlu0 0
    %2215 = vperm.xlu0 %2214, %v2088
    %v2216 = vpop.permute.xlu0 %2215
    %2217 = vset.pattern.permute.xlu0 0
    %2218 = vperm.xlu0 %2217, %v2090
    %v2219 = vpop.permute.xlu0 %2218
    %2220 = vset.pattern.permute.xlu0 0
    %2221 = vperm.xlu0 %2220, %v2092
    %v2222 = vpop.permute.xlu0 %2221
    %2223 = vset.pattern.permute.xlu0 0
    %2224 = vperm.xlu0 %2223, %v2094
    %v2225 = vpop.permute.xlu0 %2224
    %2226 = vset.pattern.permute.xlu0 0
    %2227 = vperm.xlu0 %2226, %v2096
    %v2228 = vpop.permute.xlu0 %2227
    %2229 = vset.pattern.permute.xlu0 0
    %2230 = vperm.xlu0 %2229, %v2098
    %v2231 = vpop.permute.xlu0 %2230
    %2232 = vset.pattern.permute.xlu0 0
    %2233 = vperm.xlu0 %2232, %v2100
    %v2234 = vpop.permute.xlu0 %2233
    %2235 = vset.pattern.permute.xlu0 0
    %2236 = vperm.xlu0 %2235, %v2102
    %v2237 = vpop.permute.xlu0 %2236
    %2238 = vset.pattern.permute.xlu0 0
    %2239 = vperm.xlu0 %2238, %v2104
    %v2240 = vpop.permute.xlu0 %2239
    %2241 = vset.pattern.permute.xlu0 0
    %2242 = vperm.xlu0 %2241, %v2106
    %v2243 = vpop.permute.xlu0 %2242
    %2244 = vset.pattern.permute.xlu0 0
    %2245 = vperm.xlu0 %2244, %v2108
    %v2246 = vpop.permute.xlu0 %2245
    %2247 = vset.pattern.permute.xlu0 0
    %2248 = vperm.xlu0 %2247, %v2110
    %v2249 = vpop.permute.xlu0 %2248
    %2250 = vset.pattern.permute.xlu0 0
    %2251 = vperm.xlu0 %2250, %v2112
    %v2252 = vpop.permute.xlu0 %2251
    %2253 = vset.pattern.permute.xlu0 0
    %2254 = vperm.xlu0 %2253, %v2114
    %v2255 = vpop.permute.xlu0 %2254
    %2256 = vset.pattern.permute.xlu0 0
    %2257 = vperm.xlu0 %2256, %v2116
    %v2258 = vpop.permute.xlu0 %2257
    %2259 = vset.pattern.permute.xlu0 0
    %2260 = vperm.xlu0 %2259, %v2118
    %v2261 = vpop.permute.xlu0 %2260
    %2262 = vset.pattern.permute.xlu0 0
    %2263 = vperm.xlu0 %2262, %v2120
    %v2264 = vpop.permute.xlu0 %2263
    %2265 = vset.pattern.permute.xlu0 0
    %2266 = vperm.xlu0 %2265, %v2122
    %v2267 = vpop.permute.xlu0 %2266
    %2268 = vset.pattern.permute.xlu0 0
    %2269 = vperm.xlu0 %2268, %v2124
    %v2270 = vpop.permute.xlu0 %2269
    %2271 = vset.pattern.permute.xlu0 0
    %2272 = vperm.xlu0 %2271, %v2126
    %v2273 = vpop.permute.xlu0 %2272
    %2274 = vset.pattern.permute.xlu0 0
    %2275 = vperm.xlu0 %2274, %v2128
    %v2276 = vpop.permute.xlu0 %2275
    %2277 = vset.pattern.permute.xlu0 0
    %2278 = vperm.xlu0 %2277, %v2130
    %v2279 = vpop.permute.xlu0 %2278
    %2280 = vset.pattern.permute.xlu0 0
    %2281 = vperm.xlu0 %2280, %v2132
    %v2282 = vpop.permute.xlu0 %2281
    %2283 = vset.pattern.permute.xlu0 0
    %2284 = vperm.xlu0 %2283, %v2134
    %v2285 = vpop.permute.xlu0 %2284
    %2286 = vset.pattern.permute.xlu0 0
    %2287 = vperm.xlu0 %2286, %v2136
    %v2288 = vpop.permute.xlu0 %2287
    %2289 = vset.pattern.permute.xlu0 0
    %2290 = vperm.xlu0 %2289, %v2138
    %v2291 = vpop.permute.xlu0 %2290
    %2292 = vset.pattern.permute.xlu0 0
    %2293 = vperm.xlu0 %2292, %v2140
    %v2294 = vpop.permute.xlu0 %2293
    %2295 = vset.pattern.permute.xlu0 0
    %2296 = vperm.xlu0 %2295, %v2142
    %v2297 = vpop.permute.xlu0 %2296
    %2298 = vset.pattern.permute.xlu0 0
    %2299 = vperm.xlu0 %2298, %v2144
    %v2300 = vpop.permute.xlu0 %2299
    %2301 = vset.pattern.permute.xlu0 0
    %2302 = vperm.xlu0 %2301, %v2146
    %v2303 = vpop.permute.xlu0 %2302
    %2304 = vset.pattern.permute.xlu0 0
    %2305 = vperm.xlu0 %2304, %v2148
    %v2306 = vpop.permute.xlu0 %2305
    %2307 = vset.pattern.permute.xlu0 0
    %2308 = vperm.xlu0 %2307, %v2150
    %v2309 = vpop.permute.xlu0 %2308
    %2310 = vset.pattern.permute.xlu0 0
    %2311 = vperm.xlu0 %2310, %v2152
    %v2312 = vpop.permute.xlu0 %2311
    %v2313 = vperm.slane %v2195, %v1845
    %v2314 = vperm.slane %v2198, %v1845
    %v2315 = vperm.slane %v2201, %v1845
    %v2316 = vperm.slane %v2204, %v1845
    %v2317 = vperm.slane %v2207, %v1845
    %v2318 = vperm.slane %v2210, %v1845
    %v2319 = vperm.slane %v2213, %v1845
    %v2320 = vperm.slane %v2216, %v1845
    %v2321 = vperm.slane %v2219, %v1845
    %v2322 = vperm.slane %v2222, %v1845
    %v2323 = vperm.slane %v2225, %v1845
    %v2324 = vperm.slane %v2228, %v1845
    %v2325 = vperm.slane %v2231, %v1845
    %v2326 = vperm.slane %v2234, %v1845
    %v2327 = vperm.slane %v2237, %v1845
    %v2328 = vperm.slane %v2240, %v1845
    %v2329 = vperm.slane %v2243, %v1845
    %v2330 = vperm.slane %v2246, %v1845
    %v2331 = vperm.slane %v2249, %v1845
    %v2332 = vperm.slane %v2252, %v1845
    %v2333 = vperm.slane %v2255, %v1845
    %v2334 = vperm.slane %v2258, %v1845
    %v2335 = vperm.slane %v2261, %v1845
    %v2336 = vperm.slane %v2264, %v1845
    %v2337 = vperm.slane %v2267, %v1845
    %v2338 = vperm.slane %v2270, %v1845
    %v2339 = vperm.slane %v2273, %v1845
    %v2340 = vperm.slane %v2276, %v1845
    %v2341 = vperm.slane %v2279, %v1845
    %v2342 = vperm.slane %v2282, %v1845
    %v2343 = vperm.slane %v2285, %v1845
    %v2344 = vperm.slane %v2288, %v1845
    %v2345 = vperm.slane %v2291, %v1845
    %v2346 = vperm.slane %v2294, %v1845
    %v2347 = vperm.slane %v2297, %v1845
    %v2348 = vperm.slane %v2300, %v1845
    %v2349 = vperm.slane %v2303, %v1845
    %v2350 = vperm.slane %v2306, %v1845
    %v2351 = vperm.slane %v2309, %v1845
    %v2352 = vperm.slane %v2312, %v1845
    %v2353 = vsel %vm1886, %v2314, %v2313
    %v2354 = vsel %vm1888, %v2315, %v2353
    %v2355 = vsel %vm1890, %v2316, %v2354
    %v2356 = vsel %vm1892, %v2317, %v2355
    %v2357 = vsel %vm1894, %v2318, %v2356
    %v2358 = vsel %vm1896, %v2319, %v2357
    %v2359 = vsel %vm1898, %v2320, %v2358
    %v2360 = vsel %vm1886, %v2322, %v2321
    %v2361 = vsel %vm1888, %v2323, %v2360
    %v2362 = vsel %vm1890, %v2324, %v2361
    %v2363 = vsel %vm1892, %v2325, %v2362
    %v2364 = vsel %vm1894, %v2326, %v2363
    %v2365 = vsel %vm1896, %v2327, %v2364
    %v2366 = vsel %vm1898, %v2328, %v2365
    %v2367 = vsel %vm1886, %v2330, %v2329
    %v2368 = vsel %vm1888, %v2331, %v2367
    %v2369 = vsel %vm1890, %v2332, %v2368
    %v2370 = vsel %vm1892, %v2333, %v2369
    %v2371 = vsel %vm1894, %v2334, %v2370
    %v2372 = vsel %vm1896, %v2335, %v2371
    %v2373 = vsel %vm1898, %v2336, %v2372
    %v2374 = vsel %vm1886, %v2338, %v2337
    %v2375 = vsel %vm1888, %v2339, %v2374
    %v2376 = vsel %vm1890, %v2340, %v2375
    %v2377 = vsel %vm1892, %v2341, %v2376
    %v2378 = vsel %vm1894, %v2342, %v2377
    %v2379 = vsel %vm1896, %v2343, %v2378
    %v2380 = vsel %vm1898, %v2344, %v2379
    %v2381 = vsel %vm1886, %v2346, %v2345
    %v2382 = vsel %vm1888, %v2347, %v2381
    %v2383 = vsel %vm1890, %v2348, %v2382
    %v2384 = vsel %vm1892, %v2349, %v2383
    %v2385 = vsel %vm1894, %v2350, %v2384
    %v2386 = vsel %vm1896, %v2351, %v2385
    %v2387 = vsel %vm1898, %v2352, %v2386
    %v2393 = vsel %vm76, %v2359, 0.0
    %2394 = vadd.xlane.f32.xlu0 %v2393
    %v2395 = vpop.xlane.xlu0 %2394
    %v2396 = vsel %vm76, %v2366, 0.0
    %2397 = vadd.xlane.f32.xlu0 %v2396
    %v2398 = vpop.xlane.xlu0 %2397
    %v2399 = vsel %vm76, %v2373, 0.0
    %2400 = vadd.xlane.f32.xlu0 %v2399
    %v2401 = vpop.xlane.xlu0 %2400
    %v2402 = vsel %vm76, %v2380, 0.0
    %2403 = vadd.xlane.f32.xlu0 %v2402
    %v2404 = vpop.xlane.xlu0 %2403
    %v2405 = vsel %vm76, %v2387, 0.0
    %2406 = vadd.xlane.f32.xlu0 %v2405
    %v2407 = vpop.xlane.xlu0 %2406
    %v2408 = vrcp.pop %v2395
    %v2409 = vrcp.pop %v2398
    %v2410 = vrcp.pop %v2401
    %v2411 = vrcp.pop %v2404
    %v2412 = vrcp.pop %v2407
    %v2418 = vperm.slane %v2408, 0
    %v2419 = vperm.slane %v2408, 1
    %v2420 = vperm.slane %v2408, 2
    %v2421 = vperm.slane %v2408, 3
    %v2422 = vperm.slane %v2408, 4
    %v2423 = vperm.slane %v2408, 5
    %v2424 = vperm.slane %v2408, 6
    %v2425 = vperm.slane %v2408, 7
    %v2426 = vperm.slane %v2409, 0
    %v2427 = vperm.slane %v2409, 1
    %v2428 = vperm.slane %v2409, 2
    %v2429 = vperm.slane %v2409, 3
    %v2430 = vperm.slane %v2409, 4
    %v2431 = vperm.slane %v2409, 5
    %v2432 = vperm.slane %v2409, 6
    %v2433 = vperm.slane %v2409, 7
    %v2434 = vperm.slane %v2410, 0
    %v2435 = vperm.slane %v2410, 1
    %v2436 = vperm.slane %v2410, 2
    %v2437 = vperm.slane %v2410, 3
    %v2438 = vperm.slane %v2410, 4
    %v2439 = vperm.slane %v2410, 5
    %v2440 = vperm.slane %v2410, 6
    %v2441 = vperm.slane %v2410, 7
    %v2442 = vperm.slane %v2411, 0
    %v2443 = vperm.slane %v2411, 1
    %v2444 = vperm.slane %v2411, 2
    %v2445 = vperm.slane %v2411, 3
    %v2446 = vperm.slane %v2411, 4
    %v2447 = vperm.slane %v2411, 5
    %v2448 = vperm.slane %v2411, 6
    %v2449 = vperm.slane %v2411, 7
    %v2450 = vperm.slane %v2412, 0
    %v2451 = vperm.slane %v2412, 1
    %v2452 = vperm.slane %v2412, 2
    %v2453 = vperm.slane %v2412, 3
    %v2454 = vperm.slane %v2412, 4
    %v2455 = vperm.slane %v2412, 5
    %v2456 = vperm.slane %v2412, 6
    %v2457 = vperm.slane %v2412, 7
    %v2498 = vmul.f32 %v2074, %v2418
    %v2499 = vmul.f32 %v2076, %v2419
    %v2500 = vmul.f32 %v2078, %v2420
    %v2501 = vmul.f32 %v2080, %v2421
    %v2502 = vmul.f32 %v2082, %v2422
    %v2503 = vmul.f32 %v2084, %v2423
    %v2504 = vmul.f32 %v2086, %v2424
    %v2505 = vmul.f32 %v2088, %v2425
    %v2506 = vmul.f32 %v2090, %v2426
    %v2507 = vmul.f32 %v2092, %v2427
    %v2508 = vmul.f32 %v2094, %v2428
    %v2509 = vmul.f32 %v2096, %v2429
    %v2510 = vmul.f32 %v2098, %v2430
    %v2511 = vmul.f32 %v2100, %v2431
    %v2512 = vmul.f32 %v2102, %v2432
    %v2513 = vmul.f32 %v2104, %v2433
    %v2514 = vmul.f32 %v2106, %v2434
    %v2515 = vmul.f32 %v2108, %v2435
    %v2516 = vmul.f32 %v2110, %v2436
    %v2517 = vmul.f32 %v2112, %v2437
    %v2518 = vmul.f32 %v2114, %v2438
    %v2519 = vmul.f32 %v2116, %v2439
    %v2520 = vmul.f32 %v2118, %v2440
    %v2521 = vmul.f32 %v2120, %v2441
    %v2522 = vmul.f32 %v2122, %v2442
    %v2523 = vmul.f32 %v2124, %v2443
    %v2524 = vmul.f32 %v2126, %v2444
    %v2525 = vmul.f32 %v2128, %v2445
    %v2526 = vmul.f32 %v2130, %v2446
    %v2527 = vmul.f32 %v2132, %v2447
    %v2528 = vmul.f32 %v2134, %v2448
    %v2529 = vmul.f32 %v2136, %v2449
    %v2530 = vmul.f32 %v2138, %v2450
    %v2531 = vmul.f32 %v2140, %v2451
    %v2532 = vmul.f32 %v2142, %v2452
    %v2533 = vmul.f32 %v2144, %v2453
    %v2534 = vmul.f32 %v2146, %v2454
    %v2535 = vmul.f32 %v2148, %v2455
    %v2536 = vmul.f32 %v2150, %v2456
    %v2537 = vmul.f32 %v2152, %v2457
    %v2538 = vld [vmem:[%s10] sm:$0xff]
    %v2539 = vld [vmem:[%s10 + $0x8] sm:$0xff]
    %v2540 = vld [vmem:[%s10 + $0x10] sm:$0xff]
    %v2541 = vld [vmem:[%s10 + $0x18] sm:$0xff]
    %v2542 = vld [vmem:[%s10 + $0x20] sm:$0xff]
    %v2543 = vld [vmem:[%s10 + $0x28] sm:$0xff]
    %v2544 = vld [vmem:[%s10 + $0x30] sm:$0xff]
    %v2545 = vld [vmem:[%s10 + $0x38] sm:$0xff]
    %v2546 = vld [vmem:[%s10 + $0x40] sm:$0xff]
    %v2547 = vld [vmem:[%s10 + $0x48] sm:$0xff]
    %v2548 = vld [vmem:[%s10 + $0x50] sm:$0xff]
    %v2549 = vld [vmem:[%s10 + $0x58] sm:$0xff]
    %v2550 = vld [vmem:[%s10 + $0x60] sm:$0xff]
    %v2551 = vld [vmem:[%s10 + $0x68] sm:$0xff]
    %v2552 = vld [vmem:[%s10 + $0x70] sm:$0xff]
    %v2553 = vld [vmem:[%s10 + $0x78] sm:$0xff]
    %2554 = vmatpush.msra.mxu0 %v2553
    %2555 = vmatpush.msra.mxu0 %v2552
    %2556 = vmatpush.msra.mxu0 %v2551
    %2557 = vmatpush.msra.mxu0 %v2550
    %2558 = vmatpush.msra.mxu0 %v2549
    %2559 = vmatpush.msra.mxu0 %v2548
    %2560 = vmatpush.msra.mxu0 %v2547
    %2561 = vmatpush.msra.mxu0 %v2546
    %2562 = vmatpush.msra.mxu0 %v2545
    %2563 = vmatpush.msra.mxu0 %v2544
    %2564 = vmatpush.msra.mxu0 %v2543
    %2565 = vmatpush.msra.mxu0 %v2542
    %2566 = vmatpush.msra.mxu0 %v2541
    %2567 = vmatpush.msra.mxu0 %v2540
    %2568 = vmatpush.msra.mxu0 %v2539
    %2569 = vmatpush.msra.mxu0 %v2538
    %2570 = vmatmul.f32.gmra.mxu0 %v1159
    %v2571 = vpop.f32.mrf.mxu0
    %v2572 = vadd.f32 0.0, %v2571
    %2573 = vmatmul.f32.gmra.mxu0 %v1160
    %v2574 = vpop.f32.mrf.mxu0
    %v2575 = vadd.f32 0.0, %v2574
    %2576 = vmatmul.f32.gmra.mxu0 %v1161
    %v2577 = vpop.f32.mrf.mxu0
    %v2578 = vadd.f32 0.0, %v2577
    %2579 = vmatmul.f32.gmra.mxu0 %v1162
    %v2580 = vpop.f32.mrf.mxu0
    %v2581 = vadd.f32 0.0, %v2580
    %2582 = vmatmul.f32.gmra.mxu0 %v1163
    %v2583 = vpop.f32.mrf.mxu0
    %v2584 = vadd.f32 0.0, %v2583
    %2585 = vdwg.mxu0
    %v2586 = vld [vmem:[#allocation4] sm:$0x1]
    %v2588 = vperm.slane %v2586, 0
    %2598 = vset.pattern.permute.xlu0 0
    %2599 = vperm.xlu0 %2598, %v2498
    %v2600 = vpop.permute.xlu0 %2599
    %2601 = vset.pattern.permute.xlu0 0
    %2602 = vperm.xlu0 %2601, %v2499
    %v2603 = vpop.permute.xlu0 %2602
    %2604 = vset.pattern.permute.xlu0 0
    %2605 = vperm.xlu0 %2604, %v2500
    %v2606 = vpop.permute.xlu0 %2605
    %2607 = vset.pattern.permute.xlu0 0
    %2608 = vperm.xlu0 %2607, %v2501
    %v2609 = vpop.permute.xlu0 %2608
    %2610 = vset.pattern.permute.xlu0 0
    %2611 = vperm.xlu0 %2610, %v2502
    %v2612 = vpop.permute.xlu0 %2611
    %2613 = vset.pattern.permute.xlu0 0
    %2614 = vperm.xlu0 %2613, %v2503
    %v2615 = vpop.permute.xlu0 %2614
    %2616 = vset.pattern.permute.xlu0 0
    %2617 = vperm.xlu0 %2616, %v2504
    %v2618 = vpop.permute.xlu0 %2617
    %2619 = vset.pattern.permute.xlu0 0
    %2620 = vperm.xlu0 %2619, %v2505
    %v2621 = vpop.permute.xlu0 %2620
    %v2622 = vperm.slane %v2600, %v1845
    %v2623 = vperm.slane %v2603, %v1845
    %v2624 = vperm.slane %v2606, %v1845
    %v2625 = vperm.slane %v2609, %v1845
    %v2626 = vperm.slane %v2612, %v1845
    %v2627 = vperm.slane %v2615, %v1845
    %v2628 = vperm.slane %v2618, %v1845
    %v2629 = vperm.slane %v2621, %v1845
    %v2630 = vsel %vm1886, %v2623, %v2622
    %v2631 = vsel %vm1888, %v2624, %v2630
    %v2632 = vsel %vm1890, %v2625, %v2631
    %v2633 = vsel %vm1892, %v2626, %v2632
    %v2634 = vsel %vm1894, %v2627, %v2633
    %v2635 = vsel %vm1896, %v2628, %v2634
    %v2636 = vsel %vm1898, %v2629, %v2635
    %v2637 = vsel %vm76, %v2636, 0
    %2639 = vmatpush.msra.mxu0 0.0
    %2640 = vmatpush.msra.mxu0 0.0
    %2641 = vmatpush.msra.mxu0 0.0
    %2642 = vmatpush.msra.mxu0 0.0
    %2643 = vmatpush.msra.mxu0 0.0
    %2644 = vmatpush.msra.mxu0 0.0
    %2645 = vmatpush.msra.mxu0 0.0
    %2646 = vmatpush.msra.mxu0 0.0
    %2647 = vmatpush.msra.mxu0 0.0
    %2648 = vmatpush.msra.mxu0 0.0
    %2649 = vmatpush.msra.mxu0 0.0
    %2650 = vmatpush.msra.mxu0 0.0
    %2651 = vmatpush.msra.mxu0 0.0
    %2652 = vmatpush.msra.mxu0 0.0
    %2653 = vmatpush.msra.mxu0 0.0
    %2654 = vmatpush.msra.mxu0 %v2572
    %2655 = vmatmul.f32.gmra.mxu0 %v2637
    %v2656 = vpop.f32.mrf.mxu0
    %v2657 = vadd.f32 %v2588, %v2656
    %2658 = vdwg.mxu0
    %vm2659 = vcmask 7168
    %2660 = vst.msk [vmem:[%s12] sm:$0xff] %vm2659, %v2657
    %2669 = vset.pattern.permute.xlu0 0
    %2670 = vperm.xlu0 %2669, %v2506
    %v2671 = vpop.permute.xlu0 %2670
    %2672 = vset.pattern.permute.xlu0 0
    %2673 = vperm.xlu0 %2672, %v2507
    %v2674 = vpop.permute.xlu0 %2673
    %2675 = vset.pattern.permute.xlu0 0
    %2676 = vperm.xlu0 %2675, %v2508
    %v2677 = vpop.permute.xlu0 %2676
    %2678 = vset.pattern.permute.xlu0 0
    %2679 = vperm.xlu0 %2678, %v2509
    %v2680 = vpop.permute.xlu0 %2679
    %2681 = vset.pattern.permute.xlu0 0
    %2682 = vperm.xlu0 %2681, %v2510
    %v2683 = vpop.permute.xlu0 %2682
    %2684 = vset.pattern.permute.xlu0 0
    %2685 = vperm.xlu0 %2684, %v2511
    %v2686 = vpop.permute.xlu0 %2685
    %2687 = vset.pattern.permute.xlu0 0
    %2688 = vperm.xlu0 %2687, %v2512
    %v2689 = vpop.permute.xlu0 %2688
    %2690 = vset.pattern.permute.xlu0 0
    %2691 = vperm.xlu0 %2690, %v2513
    %v2692 = vpop.permute.xlu0 %2691
    %v2693 = vperm.slane %v2671, %v1845
    %v2694 = vperm.slane %v2674, %v1845
    %v2695 = vperm.slane %v2677, %v1845
    %v2696 = vperm.slane %v2680, %v1845
    %v2697 = vperm.slane %v2683, %v1845
    %v2698 = vperm.slane %v2686, %v1845
    %v2699 = vperm.slane %v2689, %v1845
    %v2700 = vperm.slane %v2692, %v1845
    %v2701 = vsel %vm1886, %v2694, %v2693
    %v2702 = vsel %vm1888, %v2695, %v2701
    %v2703 = vsel %vm1890, %v2696, %v2702
    %v2704 = vsel %vm1892, %v2697, %v2703
    %v2705 = vsel %vm1894, %v2698, %v2704
    %v2706 = vsel %vm1896, %v2699, %v2705
    %v2707 = vsel %vm1898, %v2700, %v2706
    %v2708 = vsel %vm76, %v2707, 0
    %2710 = vmatpush.msra.mxu0 0.0
    %2711 = vmatpush.msra.mxu0 0.0
    %2712 = vmatpush.msra.mxu0 0.0
    %2713 = vmatpush.msra.mxu0 0.0
    %2714 = vmatpush.msra.mxu0 0.0
    %2715 = vmatpush.msra.mxu0 0.0
    %2716 = vmatpush.msra.mxu0 0.0
    %2717 = vmatpush.msra.mxu0 0.0
    %2718 = vmatpush.msra.mxu0 0.0
    %2719 = vmatpush.msra.mxu0 0.0
    %2720 = vmatpush.msra.mxu0 0.0
    %2721 = vmatpush.msra.mxu0 0.0
    %2722 = vmatpush.msra.mxu0 0.0
    %2723 = vmatpush.msra.mxu0 0.0
    %2724 = vmatpush.msra.mxu0 0.0
    %2725 = vmatpush.msra.mxu0 %v2575
    %2726 = vmatmul.f32.gmra.mxu0 %v2708
    %v2727 = vpop.f32.mrf.mxu0
    %v2728 = vadd.f32 %v2588, %v2727
    %2729 = vdwg.mxu0
    %2730 = vst.msk [vmem:[%s12 + $0x8] sm:$0xff] %vm2659, %v2728
    %2739 = vset.pattern.permute.xlu0 0
    %2740 = vperm.xlu0 %2739, %v2514
    %v2741 = vpop.permute.xlu0 %2740
    %2742 = vset.pattern.permute.xlu0 0
    %2743 = vperm.xlu0 %2742, %v2515
    %v2744 = vpop.permute.xlu0 %2743
    %2745 = vset.pattern.permute.xlu0 0
    %2746 = vperm.xlu0 %2745, %v2516
    %v2747 = vpop.permute.xlu0 %2746
    %2748 = vset.pattern.permute.xlu0 0
    %2749 = vperm.xlu0 %2748, %v2517
    %v2750 = vpop.permute.xlu0 %2749
    %2751 = vset.pattern.permute.xlu0 0
    %2752 = vperm.xlu0 %2751, %v2518
    %v2753 = vpop.permute.xlu0 %2752
    %2754 = vset.pattern.permute.xlu0 0
    %2755 = vperm.xlu0 %2754, %v2519
    %v2756 = vpop.permute.xlu0 %2755
    %2757 = vset.pattern.permute.xlu0 0
    %2758 = vperm.xlu0 %2757, %v2520
    %v2759 = vpop.permute.xlu0 %2758
    %2760 = vset.pattern.permute.xlu0 0
    %2761 = vperm.xlu0 %2760, %v2521
    %v2762 = vpop.permute.xlu0 %2761
    %v2763 = vperm.slane %v2741, %v1845
    %v2764 = vperm.slane %v2744, %v1845
    %v2765 = vperm.slane %v2747, %v1845
    %v2766 = vperm.slane %v2750, %v1845
    %v2767 = vperm.slane %v2753, %v1845
    %v2768 = vperm.slane %v2756, %v1845
    %v2769 = vperm.slane %v2759, %v1845
    %v2770 = vperm.slane %v2762, %v1845
    %v2771 = vsel %vm1886, %v2764, %v2763
    %v2772 = vsel %vm1888, %v2765, %v2771
    %v2773 = vsel %vm1890, %v2766, %v2772
    %v2774 = vsel %vm1892, %v2767, %v2773
    %v2775 = vsel %vm1894, %v2768, %v2774
    %v2776 = vsel %vm1896, %v2769, %v2775
    %v2777 = vsel %vm1898, %v2770, %v2776
    %v2778 = vsel %vm76, %v2777, 0
    %2780 = vmatpush.msra.mxu0 0.0
    %2781 = vmatpush.msra.mxu0 0.0
    %2782 = vmatpush.msra.mxu0 0.0
    %2783 = vmatpush.msra.mxu0 0.0
    %2784 = vmatpush.msra.mxu0 0.0
    %2785 = vmatpush.msra.mxu0 0.0
    %2786 = vmatpush.msra.mxu0 0.0
    %2787 = vmatpush.msra.mxu0 0.0
    %2788 = vmatpush.msra.mxu0 0.0
    %2789 = vmatpush.msra.mxu0 0.0
    %2790 = vmatpush.msra.mxu0 0.0
    %2791 = vmatpush.msra.mxu0 0.0
    %2792 = vmatpush.msra.mxu0 0.0
    %2793 = vmatpush.msra.mxu0 0.0
    %2794 = vmatpush.msra.mxu0 0.0
    %2795 = vmatpush.msra.mxu0 %v2578
    %2796 = vmatmul.f32.gmra.mxu0 %v2778
    %v2797 = vpop.f32.mrf.mxu0
    %v2798 = vadd.f32 %v2588, %v2797
    %2799 = vdwg.mxu0
    %2800 = vst.msk [vmem:[%s12 + $0x10] sm:$0xff] %vm2659, %v2798
    %2809 = vset.pattern.permute.xlu0 0
    %2810 = vperm.xlu0 %2809, %v2522
    %v2811 = vpop.permute.xlu0 %2810
    %2812 = vset.pattern.permute.xlu0 0
    %2813 = vperm.xlu0 %2812, %v2523
    %v2814 = vpop.permute.xlu0 %2813
    %2815 = vset.pattern.permute.xlu0 0
    %2816 = vperm.xlu0 %2815, %v2524
    %v2817 = vpop.permute.xlu0 %2816
    %2818 = vset.pattern.permute.xlu0 0
    %2819 = vperm.xlu0 %2818, %v2525
    %v2820 = vpop.permute.xlu0 %2819
    %2821 = vset.pattern.permute.xlu0 0
    %2822 = vperm.xlu0 %2821, %v2526
    %v2823 = vpop.permute.xlu0 %2822
    %2824 = vset.pattern.permute.xlu0 0
    %2825 = vperm.xlu0 %2824, %v2527
    %v2826 = vpop.permute.xlu0 %2825
    %2827 = vset.pattern.permute.xlu0 0
    %2828 = vperm.xlu0 %2827, %v2528
    %v2829 = vpop.permute.xlu0 %2828
    %2830 = vset.pattern.permute.xlu0 0
    %2831 = vperm.xlu0 %2830, %v2529
    %v2832 = vpop.permute.xlu0 %2831
    %v2833 = vperm.slane %v2811, %v1845
    %v2834 = vperm.slane %v2814, %v1845
    %v2835 = vperm.slane %v2817, %v1845
    %v2836 = vperm.slane %v2820, %v1845
    %v2837 = vperm.slane %v2823, %v1845
    %v2838 = vperm.slane %v2826, %v1845
    %v2839 = vperm.slane %v2829, %v1845
    %v2840 = vperm.slane %v2832, %v1845
    %v2841 = vsel %vm1886, %v2834, %v2833
    %v2842 = vsel %vm1888, %v2835, %v2841
    %v2843 = vsel %vm1890, %v2836, %v2842
    %v2844 = vsel %vm1892, %v2837, %v2843
    %v2845 = vsel %vm1894, %v2838, %v2844
    %v2846 = vsel %vm1896, %v2839, %v2845
    %v2847 = vsel %vm1898, %v2840, %v2846
    %v2848 = vsel %vm76, %v2847, 0
    %2850 = vmatpush.msra.mxu0 0.0
    %2851 = vmatpush.msra.mxu0 0.0
    %2852 = vmatpush.msra.mxu0 0.0
    %2853 = vmatpush.msra.mxu0 0.0
    %2854 = vmatpush.msra.mxu0 0.0
    %2855 = vmatpush.msra.mxu0 0.0
    %2856 = vmatpush.msra.mxu0 0.0
    %2857 = vmatpush.msra.mxu0 0.0
    %2858 = vmatpush.msra.mxu0 0.0
    %2859 = vmatpush.msra.mxu0 0.0
    %2860 = vmatpush.msra.mxu0 0.0
    %2861 = vmatpush.msra.mxu0 0.0
    %2862 = vmatpush.msra.mxu0 0.0
    %2863 = vmatpush.msra.mxu0 0.0
    %2864 = vmatpush.msra.mxu0 0.0
    %2865 = vmatpush.msra.mxu0 %v2581
    %2866 = vmatmul.f32.gmra.mxu0 %v2848
    %v2867 = vpop.f32.mrf.mxu0
    %v2868 = vadd.f32 %v2588, %v2867
    %2869 = vdwg.mxu0
    %2870 = vst.msk [vmem:[%s12 + $0x18] sm:$0xff] %vm2659, %v2868
    %2879 = vset.pattern.permute.xlu0 0
    %2880 = vperm.xlu0 %2879, %v2530
    %v2881 = vpop.permute.xlu0 %2880
    %2882 = vset.pattern.permute.xlu0 0
    %2883 = vperm.xlu0 %2882, %v2531
    %v2884 = vpop.permute.xlu0 %2883
    %2885 = vset.pattern.permute.xlu0 0
    %2886 = vperm.xlu0 %2885, %v2532
    %v2887 = vpop.permute.xlu0 %2886
    %2888 = vset.pattern.permute.xlu0 0
    %2889 = vperm.xlu0 %2888, %v2533
    %v2890 = vpop.permute.xlu0 %2889
    %2891 = vset.pattern.permute.xlu0 0
    %2892 = vperm.xlu0 %2891, %v2534
    %v2893 = vpop.permute.xlu0 %2892
    %2894 = vset.pattern.permute.xlu0 0
    %2895 = vperm.xlu0 %2894, %v2535
    %v2896 = vpop.permute.xlu0 %2895
    %2897 = vset.pattern.permute.xlu0 0
    %2898 = vperm.xlu0 %2897, %v2536
    %v2899 = vpop.permute.xlu0 %2898
    %2900 = vset.pattern.permute.xlu0 0
    %2901 = vperm.xlu0 %2900, %v2537
    %v2902 = vpop.permute.xlu0 %2901
    %v2903 = vperm.slane %v2881, %v1845
    %v2904 = vperm.slane %v2884, %v1845
    %v2905 = vperm.slane %v2887, %v1845
    %v2906 = vperm.slane %v2890, %v1845
    %v2907 = vperm.slane %v2893, %v1845
    %v2908 = vperm.slane %v2896, %v1845
    %v2909 = vperm.slane %v2899, %v1845
    %v2910 = vperm.slane %v2902, %v1845
    %v2911 = vsel %vm1886, %v2904, %v2903
    %v2912 = vsel %vm1888, %v2905, %v2911
    %v2913 = vsel %vm1890, %v2906, %v2912
    %v2914 = vsel %vm1892, %v2907, %v2913
    %v2915 = vsel %vm1894, %v2908, %v2914
    %v2916 = vsel %vm1896, %v2909, %v2915
    %v2917 = vsel %vm1898, %v2910, %v2916
    %v2918 = vsel %vm76, %v2917, 0
    %2920 = vmatpush.msra.mxu0 0.0
    %2921 = vmatpush.msra.mxu0 0.0
    %2922 = vmatpush.msra.mxu0 0.0
    %2923 = vmatpush.msra.mxu0 0.0
    %2924 = vmatpush.msra.mxu0 0.0
    %2925 = vmatpush.msra.mxu0 0.0
    %2926 = vmatpush.msra.mxu0 0.0
    %2927 = vmatpush.msra.mxu0 0.0
    %2928 = vmatpush.msra.mxu0 0.0
    %2929 = vmatpush.msra.mxu0 0.0
    %2930 = vmatpush.msra.mxu0 0.0
    %2931 = vmatpush.msra.mxu0 0.0
    %2932 = vmatpush.msra.mxu0 0.0
    %2933 = vmatpush.msra.mxu0 0.0
    %2934 = vmatpush.msra.mxu0 0.0
    %2935 = vmatpush.msra.mxu0 %v2584
    %2936 = vmatmul.f32.gmra.mxu0 %v2918
    %v2937 = vpop.f32.mrf.mxu0
    %v2938 = vadd.f32 %v2588, %v2937
    %2939 = vdwg.mxu0
    %2940 = vst.msk [vmem:[%s12 + $0x20] sm:$0xff] %vm2659, %v2938
    // Predicated region
    $region54: #{tpa_cnn_lstm_forward.1} parent=1 // pred_check
      _
    $region55: #{tpa_cnn_lstm_forward.1} parent=1 // pred_check_branch
      %2942 = sbr.rel (0) target = $region57
    $region56: #{tpa_cnn_lstm_forward.1} parent=1 // pred_region
      _
    $region57: #{tpa_cnn_lstm_forward.1} parent=1 // pred_fallthru
      _
    // Predicated region
    $region58: #{tpa_cnn_lstm_forward.1} parent=1 // pred_check
      _
    $region59: #{tpa_cnn_lstm_forward.1} parent=1 // pred_check_branch
      %2944 = sbr.rel (0) target = $region61
    $region60: #{tpa_cnn_lstm_forward.1} parent=1 // pred_region
      _
    $region61: #{tpa_cnn_lstm_forward.1} parent=1 // pred_fallthru
      _
    %2945 = vsyncpa [#allocation6], 1

</llo_original>
